<compile_context>
chip_gen: v6e
topology: v6e:2x2x1
jax: 0.10.0
libtpu: 0.0.40
codegen_flags: <defaults>
</compile_context>

<pallas_src>
import functools

import jax
import jax.numpy as jnp
from jax.experimental import pallas as pl
from jax.experimental.pallas import tpu as pltpu

LN_EPS = 1e-5                     # nn.LayerNorm default eps
_INV_SQRT2 = 0.7071067811865476


def _erf(x):
    # Abramowitz & Stegun 7.1.26 rational approximation, |err| <= 1.5e-7.
    a1, a2, a3, a4, a5 = 0.254829592, -0.284496736, 1.421413741, -1.453152027, 1.061405429
    p = 0.3275911
    ax = jnp.abs(x)
    t = 1.0 / (1.0 + p * ax)
    poly = t * (a1 + t * (a2 + t * (a3 + t * (a4 + t * a5))))
    y = 1.0 - poly * jnp.exp(-(ax * ax))
    return jnp.where(x >= 0.0, y, -y)


def _gelu_erf(x):
    # Exact-erf GELU (nn.GELU default); exp runs on the EUP slot.
    return 0.5 * x * (1.0 + _erf(x * _INV_SQRT2))


def _layer_norm(x, gamma, beta):
    mu = jnp.mean(x, axis=-1, keepdims=True)
    xc = x - mu
    var = jnp.mean(xc * xc, axis=-1, keepdims=True)
    return xc * jax.lax.rsqrt(var + LN_EPS) * gamma + beta


def transformer_block_kernel(num_heads, x_ref, slab_ref, wqkv_ref, wo_ref,
                             w1_ref, w2_ref, out_ref):
    H = num_heads
    x = x_ref[...]                                    # (B, S, E) f32
    B, S, E = x.shape
    hs = E // H
    M = B * S
    P = wqkv_ref.shape[1]                             # padded 3*E (lane-dense)
    FF = w1_ref.shape[1]

    # All small parameter vectors arrive as ONE packed (8, 128) slab -> one DMA.
    slab = slab_ref[...]
    g1, be1 = slab[0:1, 0:E], slab[1:2, 0:E]
    bo = slab[2:3, 0:E]
    g2, be2 = slab[3:4, 0:E], slab[4:5, 0:E]
    bm2 = slab[5:6, 0:E]
    bqkv = slab[6:7, 0:P]
    bm1 = slab[7:8, 0:FF]

    # ---------------- attention branch ----------------
    ln1 = _layer_norm(x, g1, be1)                     # (B, S, E)
    ln1_2d = ln1.reshape(M, E)                        # leading/sublane merge only

    # Fused Q|K|V projection: a single lane-dense (M,E)@(E,P) matmul.
    # The 1/sqrt(E) attention scale is pre-folded into the Q columns and bias.
    qkv = jnp.dot(ln1_2d, wqkv_ref[...],
                  preferred_element_type=jnp.float32) + bqkv              # (M, P)
    qkv3 = qkv.reshape(B, S, P)

    # Per-head attention (static tiny loop); output projection accumulated
    # head-by-head (== concat(heads) @ Wo).
    attn_acc = jnp.zeros((M, E), jnp.float32)
    for h in range(H):
        q = qkv3[:, :, h * hs:(h + 1) * hs]                               # (B,S,hs)
        k = qkv3[:, :, E + h * hs:E + (h + 1) * hs]
        v = qkv3[:, :, 2 * E + h * hs:2 * E + (h + 1) * hs]
        energy = jnp.einsum('bqd,bkd->bqk', q, k,
                            preferred_element_type=jnp.float32)           # (B,S,S)
        m = jnp.max(energy, axis=-1, keepdims=True)
        pexp = jnp.exp(energy - m)
        attn = pexp * pl.reciprocal(jnp.sum(pexp, axis=-1, keepdims=True),
                                    approx=True)
        ctx = jnp.einsum('bqk,bkd->bqd', attn, v,
                         preferred_element_type=jnp.float32)              # (B,S,hs)
        attn_acc = attn_acc + jnp.dot(ctx.reshape(M, hs), wo_ref[h],
                                      preferred_element_type=jnp.float32)
    # nn.Dropout: identity at inference / p=0.
    x1 = x + (attn_acc + bo).reshape(B, S, E)         # residual 1

    # ---------------- MLP branch (batch merged -> plain 2-D dots) ----------------
    ln2_2d = _layer_norm(x1, g2, be2).reshape(M, E)
    h1 = jnp.dot(ln2_2d, w1_ref[...], preferred_element_type=jnp.float32) + bm1
    h1 = _gelu_erf(h1)
    mlp = jnp.dot(h1, w2_ref[...], preferred_element_type=jnp.float32) + bm2
    out_ref[...] = x1 + mlp.reshape(B, S, E)          # residual 2


@functools.partial(jax.jit, static_argnums=2)
def transformer_block(x, params, num_heads):
    B, S, E = x.shape
    H = num_heads
    hs = E // H
    FF = params["w1"].shape[1]
    scale = 1.0 / (float(E) ** 0.5)   # PyTorch: energy / embed_size ** 0.5

    # ---- wrapper-side (trace-time) weight packing: zero kernel cost ----
    # Fused QKV weight (E, 3E) with Q pre-scaled; pad columns to a 128 multiple.
    wqkv = jnp.concatenate([params["wq"] * scale, params["wk"], params["wv"]], axis=1)
    bqkv = jnp.concatenate([params["bq"] * scale, params["bk"], params["bv"]], axis=1)
    P = ((3 * E + 127) // 128) * 128
    wqkv = jnp.pad(wqkv, ((0, 0), (0, P - 3 * E)))
    bqkv = jnp.pad(bqkv, ((0, 0), (0, P - 3 * E)))

    # Per-head output projection: head h consumes rows [h*hs, (h+1)*hs) of Wo.
    wo_h = params["wo"].reshape(H, hs, E)

    # Pack all sub-KiB vectors into one (8, lane) slab -> a single operand/DMA.
    lane = max(P, FF, 128)

    def row(v):
        v = v.reshape(-1)
        return jnp.pad(v, (0, lane - v.shape[0]))

    slab = jnp.stack([row(params["g1"]), row(params["be1"]), row(params["bo"]),
                      row(params["g2"]), row(params["be2"]), row(params["bm2"]),
                      row(bqkv), row(params["bm1"])], axis=0)              # (8, 128)

    kernel = functools.partial(transformer_block_kernel, H)
    vmem = pl.BlockSpec(memory_space=pltpu.MemorySpace.VMEM)
    # Single invocation (no grid): whole problem (<100 KiB) resident in VMEM.
    # TODO(synk): on v7x, reintroduce a ("parallel",) batch/seq grid once this is
    # scaled past toy size so both TensorCores are used.
    return pl.pallas_call(
        kernel,
        out_shape=jax.ShapeDtypeStruct((B, S, E), x.dtype),
        in_specs=[vmem] * 6,
        out_specs=vmem,
    )(x, slab, wqkv, wo_h, params["w1"], params["w2"])


# ---------------- pure-JAX reference (exact GELU, as in PyTorch) ----------------
def transformer_block_ref(x, params, num_heads):
    def ln(z, g, b):
        mu = z.mean(-1, keepdims=True)
        var = ((z - mu) ** 2).mean(-1, keepdims=True)
        return (z - mu) / jnp.sqrt(var + LN_EPS) * g + b

    B, S, E = x.shape
    hs = E // num_heads
    ln1 = ln(x, params["g1"], params["be1"])
    q = ln1 @ params["wq"] + params["bq"]
    k = ln1 @ params["wk"] + params["bk"]
    v = ln1 @ params["wv"] + params["bv"]
    qh = q.reshape(B, S, num_heads, hs).transpose(0, 2, 1, 3)
    kh = k.reshape(B, S, num_heads, hs).transpose(0, 2, 1, 3)
    vh = v.reshape(B, S, num_heads, hs).transpose(0, 2, 1, 3)
    energy = jnp.einsum("bhqd,bhkd->bhqk", qh, kh) / (float(E) ** 0.5)
    attn = jax.nn.softmax(energy, axis=-1)
    oh = jnp.einsum("bhqk,bhkd->bhqd", attn, vh)
    o = oh.transpose(0, 2, 1, 3).reshape(B, S, E)
    x1 = x + (o @ params["wo"] + params["bo"])
    ln2 = ln(x1, params["g2"], params["be2"])
    h1 = jax.nn.gelu(ln2 @ params["w1"] + params["bm1"], approximate=False)
    return x1 + (h1 @ params["w2"] + params["bm2"])


def init_params(key, E, FF):
    ks = jax.random.split(key, 6)
    std = 0.02

    def lin(k, din, dout):
        kw, kb = jax.random.split(k)
        return (std * jax.random.normal(kw, (din, dout), jnp.float32),
                std * jax.random.normal(kb, (1, dout), jnp.float32))

    wq, bq = lin(ks[0], E, E)
    wk, bk = lin(ks[1], E, E)
    wv, bv = lin(ks[2], E, E)
    wo, bo = lin(ks[3], E, E)
    w1, bm1 = lin(ks[4], E, FF)
    w2, bm2 = lin(ks[5], FF, E)
    return dict(
        g1=jnp.ones((1, E), jnp.float32), be1=jnp.zeros((1, E), jnp.float32),
        wq=wq, bq=bq, wk=wk, bk=bk, wv=wv, bv=bv, wo=wo, bo=bo,
        g2=jnp.ones((1, E), jnp.float32), be2=jnp.zeros((1, E), jnp.float32),
        w1=w1, bm1=bm1, w2=w2, bm2=bm2,
    )


if __name__ == "__main__":
    # Config matching the module: embed_size=32, forward_expansion=4, dropout=0.0,
    # num_attention_heads=4, qvk_bias=True; x: (B=2, S=8, E=32).
    B, S, E = 2, 8, 32
    num_heads = 4
    forward_expansion = 4
    FF = forward_expansion * E

    key = jax.random.PRNGKey(0)
    kx, kp = jax.random.split(key)
    x = jax.random.normal(kx, (B, S, E), dtype=jnp.float32)
    params = init_params(kp, E, FF)

    out = jax.block_until_ready(transformer_block(x, params, num_heads))

    ref = transformer_block_ref(x, params, num_heads)
    assert out.shape == (B, S, E)
    assert jnp.allclose(out, ref, atol=1e-3, rtol=1e-2), "mismatch vs reference"

    print("KERNEL_OK")
</pallas_src>

<mosaic_0001>
module attributes {stable_mosaic.version = 11 : i64} {
  func.func @transformer_block_kernel(%arg0: memref<2x8x32xf32, #tpu.memory_space<vmem>>, %arg1: memref<8x128xf32, #tpu.memory_space<vmem>>, %arg2: memref<32x128xf32, #tpu.memory_space<vmem>>, %arg3: memref<4x8x32xf32, #tpu.memory_space<vmem>>, %arg4: memref<32x128xf32, #tpu.memory_space<vmem>>, %arg5: memref<128x32xf32, #tpu.memory_space<vmem>>, %arg6: memref<2x8x32xf32, #tpu.memory_space<vmem>>) attributes {dimension_semantics = [], scalar_prefetch = 0 : i64, scratch_operands = 0 : i64, tpu.core_type = #tpu.core_type<tc>} {
    %c0 = arith.constant 0 : index
    %c0_0 = arith.constant 0 : index
    %c0_1 = arith.constant 0 : index
    %0 = vector.load %arg0[%c0, %c0_0, %c0_1] : memref<2x8x32xf32, #tpu.memory_space<vmem>>, vector<2x8x32xf32>
    %c0_2 = arith.constant 0 : index
    %c0_3 = arith.constant 0 : index
    %1 = vector.load %arg1[%c0_2, %c0_3] : memref<8x128xf32, #tpu.memory_space<vmem>>, vector<8x128xf32>
    %2 = vector.extract_strided_slice %1 {offsets = [0, 0], sizes = [1, 32], strides = [1, 1]} : vector<8x128xf32> to vector<1x32xf32>
    %3 = vector.extract_strided_slice %1 {offsets = [1, 0], sizes = [1, 32], strides = [1, 1]} : vector<8x128xf32> to vector<1x32xf32>
    %4 = vector.extract_strided_slice %1 {offsets = [2, 0], sizes = [1, 32], strides = [1, 1]} : vector<8x128xf32> to vector<1x32xf32>
    %5 = vector.extract_strided_slice %1 {offsets = [3, 0], sizes = [1, 32], strides = [1, 1]} : vector<8x128xf32> to vector<1x32xf32>
    %6 = vector.extract_strided_slice %1 {offsets = [4, 0], sizes = [1, 32], strides = [1, 1]} : vector<8x128xf32> to vector<1x32xf32>
    %7 = vector.extract_strided_slice %1 {offsets = [5, 0], sizes = [1, 32], strides = [1, 1]} : vector<8x128xf32> to vector<1x32xf32>
    %8 = vector.extract_strided_slice %1 {offsets = [6, 0], sizes = [1, 128], strides = [1, 1]} : vector<8x128xf32> to vector<1x128xf32>
    %9 = vector.extract_strided_slice %1 {offsets = [7, 0], sizes = [1, 128], strides = [1, 1]} : vector<8x128xf32> to vector<1x128xf32>
    %cst = arith.constant dense<0.000000e+00> : vector<2x8xf32>
    %10 = vector.multi_reduction <add>, %0, %cst [2] : vector<2x8x32xf32> to vector<2x8xf32>
    %11 = vector.shape_cast %10 : vector<2x8xf32> to vector<2x8x1xf32>
    %cst_4 = arith.constant 3.200000e+01 : f32
    %12 = vector.broadcast %cst_4 : f32 to vector<2x8x1xf32>
    %13 = arith.divf %11, %12 : vector<2x8x1xf32>
    %14 = vector.broadcast %13 : vector<2x8x1xf32> to vector<2x8x32xf32>
    %15 = arith.subf %0, %14 : vector<2x8x32xf32>
    %16 = arith.mulf %15, %15 : vector<2x8x32xf32>
    %cst_5 = arith.constant dense<0.000000e+00> : vector<2x8xf32>
    %17 = vector.multi_reduction <add>, %16, %cst_5 [2] : vector<2x8x32xf32> to vector<2x8xf32>
    %18 = vector.shape_cast %17 : vector<2x8xf32> to vector<2x8x1xf32>
    %cst_6 = arith.constant 3.200000e+01 : f32
    %19 = vector.broadcast %cst_6 : f32 to vector<2x8x1xf32>
    %20 = arith.divf %18, %19 : vector<2x8x1xf32>
    %cst_7 = arith.constant 9.99999974E-6 : f32
    %21 = vector.broadcast %cst_7 : f32 to vector<2x8x1xf32>
    %22 = arith.addf %20, %21 : vector<2x8x1xf32>
    %23 = math.rsqrt %22 : vector<2x8x1xf32>
    %24 = vector.broadcast %23 : vector<2x8x1xf32> to vector<2x8x32xf32>
    %25 = arith.mulf %15, %24 : vector<2x8x32xf32>
    %26 = vector.shape_cast %2 : vector<1x32xf32> to vector<1x1x32xf32>
    %27 = vector.broadcast %26 : vector<1x1x32xf32> to vector<2x8x32xf32>
    %28 = arith.mulf %25, %27 : vector<2x8x32xf32>
    %29 = vector.shape_cast %3 : vector<1x32xf32> to vector<1x1x32xf32>
    %30 = vector.broadcast %29 : vector<1x1x32xf32> to vector<2x8x32xf32>
    %31 = arith.addf %28, %30 : vector<2x8x32xf32>
    %32 = vector.shape_cast %31 : vector<2x8x32xf32> to vector<16x32xf32>
    %c0_8 = arith.constant 0 : index
    %c0_9 = arith.constant 0 : index
    %33 = vector.load %arg2[%c0_8, %c0_9] : memref<32x128xf32, #tpu.memory_space<vmem>>, vector<32x128xf32>
    %cst_10 = arith.constant dense<0.000000e+00> : vector<16x128xf32>
    %34 = tpu.matmul %32, %33, %cst_10 {dimension_numbers = #tpu.dot_dimension_numbers<[1], [0], [0], [1], [0, 0, 1, 1], [], []>} : vector<16x32xf32>, vector<32x128xf32>, vector<16x128xf32> -> vector<16x128xf32>
    %35 = vector.broadcast %8 : vector<1x128xf32> to vector<16x128xf32>
    %36 = arith.addf %34, %35 : vector<16x128xf32>
    %37 = vector.shape_cast %36 : vector<16x128xf32> to vector<2x8x128xf32>
    %cst_11 = arith.constant 0.000000e+00 : f32
    %38 = vector.broadcast %cst_11 : f32 to vector<16x32xf32>
    %39 = vector.extract_strided_slice %37 {offsets = [0, 0, 0], sizes = [2, 8, 8], strides = [1, 1, 1]} : vector<2x8x128xf32> to vector<2x8x8xf32>
    %40 = vector.extract_strided_slice %37 {offsets = [0, 0, 32], sizes = [2, 8, 8], strides = [1, 1, 1]} : vector<2x8x128xf32> to vector<2x8x8xf32>
    %41 = vector.extract_strided_slice %37 {offsets = [0, 0, 64], sizes = [2, 8, 8], strides = [1, 1, 1]} : vector<2x8x128xf32> to vector<2x8x8xf32>
    "tpu.trace_start"() <{level = 10 : i32, message = "bqd,bkd->bqk"}> : () -> ()
    %cst_12 = arith.constant dense<0.000000e+00> : vector<2x8x8xf32>
    %42 = tpu.matmul %39, %40, %cst_12 {dimension_numbers = #tpu.dot_dimension_numbers<[2], [2], [1], [1], [0, 0, 0, 1, 1, 1], [0], [0]>} : vector<2x8x8xf32>, vector<2x8x8xf32>, vector<2x8x8xf32> -> vector<2x8x8xf32>
    "tpu.trace_stop"() : () -> ()
    %cst_13 = arith.constant dense<0xFF800000> : vector<2x8xf32>
    %43 = vector.multi_reduction <maximumf>, %42, %cst_13 [2] : vector<2x8x8xf32> to vector<2x8xf32>
    %44 = vector.shape_cast %43 : vector<2x8xf32> to vector<2x8x1xf32>
    %45 = vector.broadcast %44 : vector<2x8x1xf32> to vector<2x8x8xf32>
    %46 = arith.subf %42, %45 : vector<2x8x8xf32>
    %47 = math.exp %46 : vector<2x8x8xf32>
    %cst_14 = arith.constant dense<0.000000e+00> : vector<2x8xf32>
    %48 = vector.multi_reduction <add>, %47, %cst_14 [2] : vector<2x8x8xf32> to vector<2x8xf32>
    %49 = vector.shape_cast %48 : vector<2x8xf32> to vector<2x8x1xf32>
    %50 = tpu.reciprocal %49 {approx = true} : vector<2x8x1xf32> -> vector<2x8x1xf32>
    %51 = vector.broadcast %50 : vector<2x8x1xf32> to vector<2x8x8xf32>
    %52 = arith.mulf %47, %51 : vector<2x8x8xf32>
    "tpu.trace_start"() <{level = 10 : i32, message = "bqk,bkd->bqd"}> : () -> ()
    %cst_15 = arith.constant dense<0.000000e+00> : vector<2x8x8xf32>
    %53 = tpu.matmul %52, %41, %cst_15 {dimension_numbers = #tpu.dot_dimension_numbers<[2], [1], [1], [2], [0, 0, 0, 1, 1, 2], [0], [0]>} : vector<2x8x8xf32>, vector<2x8x8xf32>, vector<2x8x8xf32> -> vector<2x8x8xf32>
    "tpu.trace_stop"() : () -> ()
    %54 = vector.shape_cast %53 : vector<2x8x8xf32> to vector<16x8xf32>
    %c0_16 = arith.constant 0 : index
    %c0_17 = arith.constant 0 : index
    %c0_18 = arith.constant 0 : index
    %55 = vector.load %arg3[%c0_16, %c0_17, %c0_18] : memref<4x8x32xf32, #tpu.memory_space<vmem>>, vector<1x8x32xf32>
    %56 = vector.shape_cast %55 : vector<1x8x32xf32> to vector<8x32xf32>
    %cst_19 = arith.constant dense<0.000000e+00> : vector<16x32xf32>
    %57 = tpu.matmul %54, %56, %cst_19 {dimension_numbers = #tpu.dot_dimension_numbers<[1], [0], [0], [1], [0, 0, 1, 1], [], []>} : vector<16x8xf32>, vector<8x32xf32>, vector<16x32xf32> -> vector<16x32xf32>
    %58 = arith.addf %38, %57 : vector<16x32xf32>
    %59 = vector.extract_strided_slice %37 {offsets = [0, 0, 8], sizes = [2, 8, 8], strides = [1, 1, 1]} : vector<2x8x128xf32> to vector<2x8x8xf32>
    %60 = vector.extract_strided_slice %37 {offsets = [0, 0, 40], sizes = [2, 8, 8], strides = [1, 1, 1]} : vector<2x8x128xf32> to vector<2x8x8xf32>
    %61 = vector.extract_strided_slice %37 {offsets = [0, 0, 72], sizes = [2, 8, 8], strides = [1, 1, 1]} : vector<2x8x128xf32> to vector<2x8x8xf32>
    "tpu.trace_start"() <{level = 10 : i32, message = "bqd,bkd->bqk"}> : () -> ()
    %cst_20 = arith.constant dense<0.000000e+00> : vector<2x8x8xf32>
    %62 = tpu.matmul %59, %60, %cst_20 {dimension_numbers = #tpu.dot_dimension_numbers<[2], [2], [1], [1], [0, 0, 0, 1, 1, 1], [0], [0]>} : vector<2x8x8xf32>, vector<2x8x8xf32>, vector<2x8x8xf32> -> vector<2x8x8xf32>
    "tpu.trace_stop"() : () -> ()
    %cst_21 = arith.constant dense<0xFF800000> : vector<2x8xf32>
    %63 = vector.multi_reduction <maximumf>, %62, %cst_21 [2] : vector<2x8x8xf32> to vector<2x8xf32>
    %64 = vector.shape_cast %63 : vector<2x8xf32> to vector<2x8x1xf32>
    %65 = vector.broadcast %64 : vector<2x8x1xf32> to vector<2x8x8xf32>
    %66 = arith.subf %62, %65 : vector<2x8x8xf32>
    %67 = math.exp %66 : vector<2x8x8xf32>
    %cst_22 = arith.constant dense<0.000000e+00> : vector<2x8xf32>
    %68 = vector.multi_reduction <add>, %67, %cst_22 [2] : vector<2x8x8xf32> to vector<2x8xf32>
    %69 = vector.shape_cast %68 : vector<2x8xf32> to vector<2x8x1xf32>
    %70 = tpu.reciprocal %69 {approx = true} : vector<2x8x1xf32> -> vector<2x8x1xf32>
    %71 = vector.broadcast %70 : vector<2x8x1xf32> to vector<2x8x8xf32>
    %72 = arith.mulf %67, %71 : vector<2x8x8xf32>
    "tpu.trace_start"() <{level = 10 : i32, message = "bqk,bkd->bqd"}> : () -> ()
    %cst_23 = arith.constant dense<0.000000e+00> : vector<2x8x8xf32>
    %73 = tpu.matmul %72, %61, %cst_23 {dimension_numbers = #tpu.dot_dimension_numbers<[2], [1], [1], [2], [0, 0, 0, 1, 1, 2], [0], [0]>} : vector<2x8x8xf32>, vector<2x8x8xf32>, vector<2x8x8xf32> -> vector<2x8x8xf32>
    "tpu.trace_stop"() : () -> ()
    %74 = vector.shape_cast %73 : vector<2x8x8xf32> to vector<16x8xf32>
    %c1 = arith.constant 1 : index
    %c0_24 = arith.constant 0 : index
    %c0_25 = arith.constant 0 : index
    %75 = vector.load %arg3[%c1, %c0_24, %c0_25] : memref<4x8x32xf32, #tpu.memory_space<vmem>>, vector<1x8x32xf32>
    %76 = vector.shape_cast %75 : vector<1x8x32xf32> to vector<8x32xf32>
    %cst_26 = arith.constant dense<0.000000e+00> : vector<16x32xf32>
    %77 = tpu.matmul %74, %76, %cst_26 {dimension_numbers = #tpu.dot_dimension_numbers<[1], [0], [0], [1], [0, 0, 1, 1], [], []>} : vector<16x8xf32>, vector<8x32xf32>, vector<16x32xf32> -> vector<16x32xf32>
    %78 = arith.addf %58, %77 : vector<16x32xf32>
    %79 = vector.extract_strided_slice %37 {offsets = [0, 0, 16], sizes = [2, 8, 8], strides = [1, 1, 1]} : vector<2x8x128xf32> to vector<2x8x8xf32>
    %80 = vector.extract_strided_slice %37 {offsets = [0, 0, 48], sizes = [2, 8, 8], strides = [1, 1, 1]} : vector<2x8x128xf32> to vector<2x8x8xf32>
    %81 = vector.extract_strided_slice %37 {offsets = [0, 0, 80], sizes = [2, 8, 8], strides = [1, 1, 1]} : vector<2x8x128xf32> to vector<2x8x8xf32>
    "tpu.trace_start"() <{level = 10 : i32, message = "bqd,bkd->bqk"}> : () -> ()
    %cst_27 = arith.constant dense<0.000000e+00> : vector<2x8x8xf32>
    %82 = tpu.matmul %79, %80, %cst_27 {dimension_numbers = #tpu.dot_dimension_numbers<[2], [2], [1], [1], [0, 0, 0, 1, 1, 1], [0], [0]>} : vector<2x8x8xf32>, vector<2x8x8xf32>, vector<2x8x8xf32> -> vector<2x8x8xf32>
    "tpu.trace_stop"() : () -> ()
    %cst_28 = arith.constant dense<0xFF800000> : vector<2x8xf32>
    %83 = vector.multi_reduction <maximumf>, %82, %cst_28 [2] : vector<2x8x8xf32> to vector<2x8xf32>
    %84 = vector.shape_cast %83 : vector<2x8xf32> to vector<2x8x1xf32>
    %85 = vector.broadcast %84 : vector<2x8x1xf32> to vector<2x8x8xf32>
    %86 = arith.subf %82, %85 : vector<2x8x8xf32>
    %87 = math.exp %86 : vector<2x8x8xf32>
    %cst_29 = arith.constant dense<0.000000e+00> : vector<2x8xf32>
    %88 = vector.multi_reduction <add>, %87, %cst_29 [2] : vector<2x8x8xf32> to vector<2x8xf32>
    %89 = vector.shape_cast %88 : vector<2x8xf32> to vector<2x8x1xf32>
    %90 = tpu.reciprocal %89 {approx = true} : vector<2x8x1xf32> -> vector<2x8x1xf32>
    %91 = vector.broadcast %90 : vector<2x8x1xf32> to vector<2x8x8xf32>
    %92 = arith.mulf %87, %91 : vector<2x8x8xf32>
    "tpu.trace_start"() <{level = 10 : i32, message = "bqk,bkd->bqd"}> : () -> ()
    %cst_30 = arith.constant dense<0.000000e+00> : vector<2x8x8xf32>
    %93 = tpu.matmul %92, %81, %cst_30 {dimension_numbers = #tpu.dot_dimension_numbers<[2], [1], [1], [2], [0, 0, 0, 1, 1, 2], [0], [0]>} : vector<2x8x8xf32>, vector<2x8x8xf32>, vector<2x8x8xf32> -> vector<2x8x8xf32>
    "tpu.trace_stop"() : () -> ()
    %94 = vector.shape_cast %93 : vector<2x8x8xf32> to vector<16x8xf32>
    %c2 = arith.constant 2 : index
    %c0_31 = arith.constant 0 : index
    %c0_32 = arith.constant 0 : index
    %95 = vector.load %arg3[%c2, %c0_31, %c0_32] : memref<4x8x32xf32, #tpu.memory_space<vmem>>, vector<1x8x32xf32>
    %96 = vector.shape_cast %95 : vector<1x8x32xf32> to vector<8x32xf32>
    %cst_33 = arith.constant dense<0.000000e+00> : vector<16x32xf32>
    %97 = tpu.matmul %94, %96, %cst_33 {dimension_numbers = #tpu.dot_dimension_numbers<[1], [0], [0], [1], [0, 0, 1, 1], [], []>} : vector<16x8xf32>, vector<8x32xf32>, vector<16x32xf32> -> vector<16x32xf32>
    %98 = arith.addf %78, %97 : vector<16x32xf32>
    %99 = vector.extract_strided_slice %37 {offsets = [0, 0, 24], sizes = [2, 8, 8], strides = [1, 1, 1]} : vector<2x8x128xf32> to vector<2x8x8xf32>
    %100 = vector.extract_strided_slice %37 {offsets = [0, 0, 56], sizes = [2, 8, 8], strides = [1, 1, 1]} : vector<2x8x128xf32> to vector<2x8x8xf32>
    %101 = vector.extract_strided_slice %37 {offsets = [0, 0, 88], sizes = [2, 8, 8], strides = [1, 1, 1]} : vector<2x8x128xf32> to vector<2x8x8xf32>
    "tpu.trace_start"() <{level = 10 : i32, message = "bqd,bkd->bqk"}> : () -> ()
    %cst_34 = arith.constant dense<0.000000e+00> : vector<2x8x8xf32>
    %102 = tpu.matmul %99, %100, %cst_34 {dimension_numbers = #tpu.dot_dimension_numbers<[2], [2], [1], [1], [0, 0, 0, 1, 1, 1], [0], [0]>} : vector<2x8x8xf32>, vector<2x8x8xf32>, vector<2x8x8xf32> -> vector<2x8x8xf32>
    "tpu.trace_stop"() : () -> ()
    %cst_35 = arith.constant dense<0xFF800000> : vector<2x8xf32>
    %103 = vector.multi_reduction <maximumf>, %102, %cst_35 [2] : vector<2x8x8xf32> to vector<2x8xf32>
    %104 = vector.shape_cast %103 : vector<2x8xf32> to vector<2x8x1xf32>
    %105 = vector.broadcast %104 : vector<2x8x1xf32> to vector<2x8x8xf32>
    %106 = arith.subf %102, %105 : vector<2x8x8xf32>
    %107 = math.exp %106 : vector<2x8x8xf32>
    %cst_36 = arith.constant dense<0.000000e+00> : vector<2x8xf32>
    %108 = vector.multi_reduction <add>, %107, %cst_36 [2] : vector<2x8x8xf32> to vector<2x8xf32>
    %109 = vector.shape_cast %108 : vector<2x8xf32> to vector<2x8x1xf32>
    %110 = tpu.reciprocal %109 {approx = true} : vector<2x8x1xf32> -> vector<2x8x1xf32>
    %111 = vector.broadcast %110 : vector<2x8x1xf32> to vector<2x8x8xf32>
    %112 = arith.mulf %107, %111 : vector<2x8x8xf32>
    "tpu.trace_start"() <{level = 10 : i32, message = "bqk,bkd->bqd"}> : () -> ()
    %cst_37 = arith.constant dense<0.000000e+00> : vector<2x8x8xf32>
    %113 = tpu.matmul %112, %101, %cst_37 {dimension_numbers = #tpu.dot_dimension_numbers<[2], [1], [1], [2], [0, 0, 0, 1, 1, 2], [0], [0]>} : vector<2x8x8xf32>, vector<2x8x8xf32>, vector<2x8x8xf32> -> vector<2x8x8xf32>
    "tpu.trace_stop"() : () -> ()
    %114 = vector.shape_cast %113 : vector<2x8x8xf32> to vector<16x8xf32>
    %c3 = arith.constant 3 : index
    %c0_38 = arith.constant 0 : index
    %c0_39 = arith.constant 0 : index
    %115 = vector.load %arg3[%c3, %c0_38, %c0_39] : memref<4x8x32xf32, #tpu.memory_space<vmem>>, vector<1x8x32xf32>
    %116 = vector.shape_cast %115 : vector<1x8x32xf32> to vector<8x32xf32>
    %cst_40 = arith.constant dense<0.000000e+00> : vector<16x32xf32>
    %117 = tpu.matmul %114, %116, %cst_40 {dimension_numbers = #tpu.dot_dimension_numbers<[1], [0], [0], [1], [0, 0, 1, 1], [], []>} : vector<16x8xf32>, vector<8x32xf32>, vector<16x32xf32> -> vector<16x32xf32>
    %118 = arith.addf %98, %117 : vector<16x32xf32>
    %119 = vector.broadcast %4 : vector<1x32xf32> to vector<16x32xf32>
    %120 = arith.addf %118, %119 : vector<16x32xf32>
    %121 = vector.shape_cast %120 : vector<16x32xf32> to vector<2x8x32xf32>
    %122 = arith.addf %0, %121 : vector<2x8x32xf32>
    %cst_41 = arith.constant dense<0.000000e+00> : vector<2x8xf32>
    %123 = vector.multi_reduction <add>, %122, %cst_41 [2] : vector<2x8x32xf32> to vector<2x8xf32>
    %124 = vector.shape_cast %123 : vector<2x8xf32> to vector<2x8x1xf32>
    %cst_42 = arith.constant 3.200000e+01 : f32
    %125 = vector.broadcast %cst_42 : f32 to vector<2x8x1xf32>
    %126 = arith.divf %124, %125 : vector<2x8x1xf32>
    %127 = vector.broadcast %126 : vector<2x8x1xf32> to vector<2x8x32xf32>
    %128 = arith.subf %122, %127 : vector<2x8x32xf32>
    %129 = arith.mulf %128, %128 : vector<2x8x32xf32>
    %cst_43 = arith.constant dense<0.000000e+00> : vector<2x8xf32>
    %130 = vector.multi_reduction <add>, %129, %cst_43 [2] : vector<2x8x32xf32> to vector<2x8xf32>
    %131 = vector.shape_cast %130 : vector<2x8xf32> to vector<2x8x1xf32>
    %cst_44 = arith.constant 3.200000e+01 : f32
    %132 = vector.broadcast %cst_44 : f32 to vector<2x8x1xf32>
    %133 = arith.divf %131, %132 : vector<2x8x1xf32>
    %cst_45 = arith.constant 9.99999974E-6 : f32
    %134 = vector.broadcast %cst_45 : f32 to vector<2x8x1xf32>
    %135 = arith.addf %133, %134 : vector<2x8x1xf32>
    %136 = math.rsqrt %135 : vector<2x8x1xf32>
    %137 = vector.broadcast %136 : vector<2x8x1xf32> to vector<2x8x32xf32>
    %138 = arith.mulf %128, %137 : vector<2x8x32xf32>
    %139 = vector.shape_cast %5 : vector<1x32xf32> to vector<1x1x32xf32>
    %140 = vector.broadcast %139 : vector<1x1x32xf32> to vector<2x8x32xf32>
    %141 = arith.mulf %138, %140 : vector<2x8x32xf32>
    %142 = vector.shape_cast %6 : vector<1x32xf32> to vector<1x1x32xf32>
    %143 = vector.broadcast %142 : vector<1x1x32xf32> to vector<2x8x32xf32>
    %144 = arith.addf %141, %143 : vector<2x8x32xf32>
    %145 = vector.shape_cast %144 : vector<2x8x32xf32> to vector<16x32xf32>
    %c0_46 = arith.constant 0 : index
    %c0_47 = arith.constant 0 : index
    %146 = vector.load %arg4[%c0_46, %c0_47] : memref<32x128xf32, #tpu.memory_space<vmem>>, vector<32x128xf32>
    %cst_48 = arith.constant dense<0.000000e+00> : vector<16x128xf32>
    %147 = tpu.matmul %145, %146, %cst_48 {dimension_numbers = #tpu.dot_dimension_numbers<[1], [0], [0], [1], [0, 0, 1, 1], [], []>} : vector<16x32xf32>, vector<32x128xf32>, vector<16x128xf32> -> vector<16x128xf32>
    %148 = vector.broadcast %9 : vector<1x128xf32> to vector<16x128xf32>
    %149 = arith.addf %147, %148 : vector<16x128xf32>
    %cst_49 = arith.constant 5.000000e-01 : f32
    %150 = vector.broadcast %cst_49 : f32 to vector<16x128xf32>
    %151 = arith.mulf %150, %149 : vector<16x128xf32>
    %cst_50 = arith.constant 0.707106769 : f32
    %152 = vector.broadcast %cst_50 : f32 to vector<16x128xf32>
    %153 = arith.mulf %149, %152 : vector<16x128xf32>
    %154 = math.absf %153 : vector<16x128xf32>
    %cst_51 = arith.constant 0.327591091 : f32
    %155 = vector.broadcast %cst_51 : f32 to vector<16x128xf32>
    %156 = arith.mulf %155, %154 : vector<16x128xf32>
    %cst_52 = arith.constant 1.000000e+00 : f32
    %157 = vector.broadcast %cst_52 : f32 to vector<16x128xf32>
    %158 = arith.addf %157, %156 : vector<16x128xf32>
    %cst_53 = arith.constant 1.000000e+00 : f32
    %159 = vector.broadcast %cst_53 : f32 to vector<16x128xf32>
    %160 = arith.divf %159, %158 : vector<16x128xf32>
    %cst_54 = arith.constant 1.06140542 : f32
    %161 = vector.broadcast %cst_54 : f32 to vector<16x128xf32>
    %162 = arith.mulf %160, %161 : vector<16x128xf32>
    %cst_55 = arith.constant -1.45315206 : f32
    %163 = vector.broadcast %cst_55 : f32 to vector<16x128xf32>
    %164 = arith.addf %163, %162 : vector<16x128xf32>
    %165 = arith.mulf %160, %164 : vector<16x128xf32>
    %cst_56 = arith.constant 1.42141378 : f32
    %166 = vector.broadcast %cst_56 : f32 to vector<16x128xf32>
    %167 = arith.addf %166, %165 : vector<16x128xf32>
    %168 = arith.mulf %160, %167 : vector<16x128xf32>
    %cst_57 = arith.constant -0.284496725 : f32
    %169 = vector.broadcast %cst_57 : f32 to vector<16x128xf32>
    %170 = arith.addf %169, %168 : vector<16x128xf32>
    %171 = arith.mulf %160, %170 : vector<16x128xf32>
    %cst_58 = arith.constant 0.254829586 : f32
    %172 = vector.broadcast %cst_58 : f32 to vector<16x128xf32>
    %173 = arith.addf %172, %171 : vector<16x128xf32>
    %174 = arith.mulf %160, %173 : vector<16x128xf32>
    %175 = arith.mulf %154, %154 : vector<16x128xf32>
    %cst_59 = arith.constant 0.000000e+00 : f32
    %176 = vector.broadcast %cst_59 : f32 to vector<16x128xf32>
    %177 = arith.subf %176, %175 : vector<16x128xf32>
    %178 = math.exp %177 : vector<16x128xf32>
    %179 = arith.mulf %174, %178 : vector<16x128xf32>
    %cst_60 = arith.constant 1.000000e+00 : f32
    %180 = vector.broadcast %cst_60 : f32 to vector<16x128xf32>
    %181 = arith.subf %180, %179 : vector<16x128xf32>
    %cst_61 = arith.constant 0.000000e+00 : f32
    %182 = vector.broadcast %cst_61 : f32 to vector<16x128xf32>
    %183 = arith.cmpf oge, %153, %182 : vector<16x128xf32>
    %cst_62 = arith.constant 0.000000e+00 : f32
    %184 = vector.broadcast %cst_62 : f32 to vector<16x128xf32>
    %185 = arith.subf %184, %181 : vector<16x128xf32>
    %186 = arith.select %183, %181, %185 : vector<16x128xi1>, vector<16x128xf32>
    %cst_63 = arith.constant 1.000000e+00 : f32
    %187 = vector.broadcast %cst_63 : f32 to vector<16x128xf32>
    %188 = arith.addf %187, %186 : vector<16x128xf32>
    %189 = arith.mulf %151, %188 : vector<16x128xf32>
    %c0_64 = arith.constant 0 : index
    %c0_65 = arith.constant 0 : index
    %190 = vector.load %arg5[%c0_64, %c0_65] : memref<128x32xf32, #tpu.memory_space<vmem>>, vector<128x32xf32>
    %cst_66 = arith.constant dense<0.000000e+00> : vector<16x32xf32>
    %191 = tpu.matmul %189, %190, %cst_66 {dimension_numbers = #tpu.dot_dimension_numbers<[1], [0], [0], [1], [0, 0, 1, 1], [], []>} : vector<16x128xf32>, vector<128x32xf32>, vector<16x32xf32> -> vector<16x32xf32>
    %192 = vector.broadcast %7 : vector<1x32xf32> to vector<16x32xf32>
    %193 = arith.addf %191, %192 : vector<16x32xf32>
    %194 = vector.shape_cast %193 : vector<16x32xf32> to vector<2x8x32xf32>
    %195 = arith.addf %122, %194 : vector<2x8x32xf32>
    %c0_67 = arith.constant 0 : index
    %c0_68 = arith.constant 0 : index
    %c0_69 = arith.constant 0 : index
    %196 = vector.load %arg6[%c0_67, %c0_68, %c0_69] : memref<2x8x32xf32, #tpu.memory_space<vmem>>, vector<2x8x32xf32>
    tpu.vector_store %arg6[%c0_67, %c0_68, %c0_69], %195 {strides = array<i32>} : memref<2x8x32xf32, #tpu.memory_space<vmem>>, vector<2x8x32xf32>,
    return
  }
}

</mosaic_0001>

<llo_original>
// kernel: transformer_block.1
$region0: #{transformer_block.1}
  #allocation0 [shape = 'u32[]', space=smem, size = 0x4, offset = 0x4, fixed_abs, tag = 'smem constant byte address 0x4 - core index']
  #allocation1 [shape = 'u32[144,128]{1,0:T(1,128)}', space=vmem, size = 0x12000, scoped, tag = 'internal scratch']
  %s0 = inlined_call_operand.vmem [shape: f32[2,8,32], index: 0, kind: input, shape index: {}]
  %s1 = inlined_call_operand.vmem [shape: f32[8,128], index: 1, kind: input, shape index: {}]
  %s2 = inlined_call_operand.vmem [shape: f32[32,128], index: 2, kind: input, shape index: {}]
  %s3 = inlined_call_operand.vmem [shape: f32[4,8,32], index: 3, kind: input, shape index: {}]
  %s4 = inlined_call_operand.vmem [shape: f32[32,128], index: 4, kind: input, shape index: {}]
  %s5 = inlined_call_operand.vmem [shape: f32[128,32], index: 5, kind: input, shape index: {}]
  %s6 = inlined_call_operand.hbm [shape: f32[2,8,32], index: 6, kind: output, shape index: {}]
  %s7 = sld [smem:[#allocation0]]
  $region34: #{transformer_block.1} parent=0
    _
  %s9 = ssub.s32 1, %s7
  %s10 = scalar_select 0, %s9, %s7
  $region1: #{transformer_block.1} parent=0
    #allocation2 [shape = 'u8[8192]{0}', space=vmem, size = 0x2000, scoped, tag = 'output window, operand 0, single buffered']
    #allocation3 [shape = 's32[1]{0}', space=sflag, size = 0x4, scoped, tag = 'scoped memory for transformer_block.1']
    %11 = vsyncpa [#allocation3], 0
    // Predicated region
    $region2: #{transformer_block.1} parent=1 // pred_check
      _
    $region3: #{transformer_block.1} parent=1 // pred_check_branch
      %13 = sbr.rel (0) target = $region5
    $region4: #{transformer_block.1} parent=1 // pred_region
      _
    $region5: #{transformer_block.1} parent=1 // pred_fallthru
      _
    // Predicated region
    $region6: #{transformer_block.1} parent=1 // pred_check
      _
    $region7: #{transformer_block.1} parent=1 // pred_check_branch
      %15 = sbr.rel (0) target = $region9
    $region8: #{transformer_block.1} parent=1 // pred_region
      _
    $region9: #{transformer_block.1} parent=1 // pred_fallthru
      _
    // Predicated region
    $region10: #{transformer_block.1} parent=1 // pred_check
      _
    $region11: #{transformer_block.1} parent=1 // pred_check_branch
      %17 = sbr.rel (0) target = $region13
    $region12: #{transformer_block.1} parent=1 // pred_region
      _
    $region13: #{transformer_block.1} parent=1 // pred_fallthru
      _
    // Predicated region
    $region14: #{transformer_block.1} parent=1 // pred_check
      _
    $region15: #{transformer_block.1} parent=1 // pred_check_branch
      %19 = sbr.rel (0) target = $region17
    $region16: #{transformer_block.1} parent=1 // pred_region
      _
    $region17: #{transformer_block.1} parent=1 // pred_fallthru
      _
    // Predicated region
    $region18: #{transformer_block.1} parent=1 // pred_check
      _
    $region19: #{transformer_block.1} parent=1 // pred_check_branch
      %21 = sbr.rel (0) target = $region21
    $region20: #{transformer_block.1} parent=1 // pred_region
      _
    $region21: #{transformer_block.1} parent=1 // pred_fallthru
      _
    // Predicated region
    $region22: #{transformer_block.1} parent=1 // pred_check
      _
    $region23: #{transformer_block.1} parent=1 // pred_check_branch
      %23 = sbr.rel (0) target = $region25
    $region24: #{transformer_block.1} parent=1 // pred_region
      _
    $region25: #{transformer_block.1} parent=1 // pred_fallthru
      _
    %v24 = vld [vmem:[%s0] sm:$0xff]
    %v25 = vld [vmem:[%s0 + $0x8] sm:$0xff]
    %v26 = vld [vmem:[%s1] sm:$0xff]
    %vm27 = vcmask 261120
    %v28 = vsel %vm27, %v24, 0.0
    %29 = vadd.xlane.f32.xlu0 %v28
    %v30 = vpop.xlane.xlu0 %29
    %v31 = vsel %vm27, %v25, 0.0
    %32 = vadd.xlane.f32.xlu0 %v31
    %v33 = vpop.xlane.xlu0 %32
    %v34 = vrcp.pop 32.0
    %v35 = vmul.f32 %v30, %v34
    %v36 = vmul.f32 %v33, %v34
    %v37 = vsub.f32 %v24, %v35
    %v38 = vsub.f32 %v25, %v36
    %v39 = vmul.f32 %v37, %v37
    %v40 = vmul.f32 %v38, %v38
    %v41 = vsel %vm27, %v39, 0.0
    %42 = vadd.xlane.f32.xlu0 %v41
    %v43 = vpop.xlane.xlu0 %42
    %v44 = vsel %vm27, %v40, 0.0
    %45 = vadd.xlane.f32.xlu0 %v44
    %v46 = vpop.xlane.xlu0 %45
    %v47 = vmul.f32 %v43, %v34
    %v48 = vmul.f32 %v46, %v34
    %v49 = vadd.f32 %v47, 1e-05
    %v50 = vadd.f32 %v48, 1e-05
    %v51 = vrsqrt.pop %v49
    %v52 = vrsqrt.pop %v50
    %v53 = vmul.f32 %v37, %v51
    %v54 = vmul.f32 %v38, %v52
    %v55 = vlaneseq
    %v56 = vshrl.u32 %v55, 7
    %v57 = vsub.s32 0, %v56
    %v58 = vrot.slane %v26, %v57
    %v59 = vmul.f32 %v53, %v58
    %v60 = vmul.f32 %v54, %v58
    %v61 = vlaneseq
    %v62 = vshrl.u32 %v61, 7
    %v63 = vsub.s32 1, %v62
    %v64 = vrot.slane %v26, %v63
    %v65 = vadd.f32 %v59, %v64
    %v66 = vadd.f32 %v60, %v64
    %v67 = vld [vmem:[%s2] sm:$0xff]
    %v68 = vld [vmem:[%s2 + $0x8] sm:$0xff]
    %v69 = vld [vmem:[%s2 + $0x10] sm:$0xff]
    %v70 = vld [vmem:[%s2 + $0x18] sm:$0xff]
    %v71 = vlaneseq
    %v72 = vshrl.u32 %v71, 7
    %v73 = vsub.s32 6, %v72
    %v74 = vrot.slane %v26, %v73
    %v76 = vsel %vm27, %v65, 0
    %v79 = vsel %vm27, %v66, 0
    %81 = vmatprep.subr.mxu0 0.0
    %82 = vmatpush1.msra.mxu0 0.0
    %83 = vmatprep.subr.mxu0 0.0
    %84 = vmatpush1.msra.mxu0 0.0
    %85 = vmatprep.subr.mxu0 0.0
    %86 = vmatpush1.msra.mxu0 0.0
    %87 = vmatprep.subr.mxu0 0.0
    %88 = vmatpush1.msra.mxu0 0.0
    %89 = vmatprep.subr.mxu0 0.0
    %90 = vmatpush1.msra.mxu0 0.0
    %91 = vmatprep.subr.mxu0 0.0
    %92 = vmatpush1.msra.mxu0 0.0
    %93 = vmatprep.subr.mxu0 0.0
    %94 = vmatpush1.msra.mxu0 0.0
    %95 = vmatprep.subr.mxu0 0.0
    %96 = vmatpush1.msra.mxu0 0.0
    %97 = vmatprep.subr.mxu0 0.0
    %98 = vmatpush1.msra.mxu0 0.0
    %99 = vmatprep.subr.mxu0 0.0
    %100 = vmatpush1.msra.mxu0 0.0
    %101 = vmatprep.subr.mxu0 0.0
    %102 = vmatpush1.msra.mxu0 0.0
    %103 = vmatprep.subr.mxu0 0.0
    %104 = vmatpush1.msra.mxu0 0.0
    %105 = vmatprep.subr.mxu0 0.0
    %106 = vmatpush1.msra.mxu0 %v70
    %107 = vmatprep.subr.mxu0 0.0
    %108 = vmatpush1.msra.mxu0 %v69
    %109 = vmatprep.subr.mxu0 0.0
    %110 = vmatpush1.msra.mxu0 %v68
    %111 = vmatprep.subr.mxu0 0.0
    %112 = vmatpush1.msra.mxu0 %v67
    %113 = vmatprep.subr.mxu0 0.0
    %114 = vmatpush2.msra.mxu0 0.0
    %115 = vmatprep.subr.mxu0 0.0
    %116 = vmatpush2.msra.mxu0 0.0
    %117 = vmatprep.subr.mxu0 0.0
    %118 = vmatpush2.msra.mxu0 0.0
    %119 = vmatprep.subr.mxu0 0.0
    %120 = vmatpush2.msra.mxu0 0.0
    %121 = vmatprep.subr.mxu0 0.0
    %122 = vmatpush2.msra.mxu0 0.0
    %123 = vmatprep.subr.mxu0 0.0
    %124 = vmatpush2.msra.mxu0 0.0
    %125 = vmatprep.subr.mxu0 0.0
    %126 = vmatpush2.msra.mxu0 0.0
    %127 = vmatprep.subr.mxu0 0.0
    %128 = vmatpush2.msra.mxu0 0.0
    %129 = vmatprep.subr.mxu0 0.0
    %130 = vmatpush2.msra.mxu0 0.0
    %131 = vmatprep.subr.mxu0 0.0
    %132 = vmatpush2.msra.mxu0 0.0
    %133 = vmatprep.subr.mxu0 0.0
    %134 = vmatpush2.msra.mxu0 0.0
    %135 = vmatprep.subr.mxu0 0.0
    %136 = vmatpush2.msra.mxu0 0.0
    %137 = vmatprep.subr.mxu0 0.0
    %138 = vmatpush2.msra.mxu0 0.0
    %139 = vmatprep.subr.mxu0 0.0
    %140 = vmatpush2.msra.mxu0 0.0
    %141 = vmatprep.subr.mxu0 0.0
    %142 = vmatpush2.msra.mxu0 0.0
    %143 = vmatprep.subr.mxu0 0.0
    %144 = vmatpush2.msra.mxu0 0.0
    %145 = vmatprep.mubr.f32.mxu0 0.0
    %146 = vmatmul.mubr.f32.gmra.mxu0 %v76
    %v147 = vpop.f32.mrf.mxu0
    %v148 = vadd.f32 %v74, %v147
    %v149 = vpop.f32.mrf.mxu0
    %150 = vmatprep.mubr.f32.mxu0 0.0
    %151 = vmatmul.mubr.f32.gmra.mxu0 %v79
    %v152 = vpop.f32.mrf.mxu0
    %v153 = vadd.f32 %v74, %v152
    %v154 = vpop.f32.mrf.mxu0
    %155 = vdwg.mxu0
    %157 = vrot.lane.b32.xlu0 %v148, 96
    %v158 = vpop.permute.xlu0 %157
    %vm159 = vcmask 64512
    %v160 = vsel %vm159, %v148, 0
    %v162 = vsel %vm159, %v158, 0
    %164 = vmatprep.subr.mxu0 0.0
    %165 = vmatpush1.xpose.msra.mxu0 0.0
    %166 = vmatprep.subr.mxu0 0.0
    %167 = vmatpush1.xpose.msra.mxu0 0.0
    %168 = vmatprep.subr.mxu0 0.0
    %169 = vmatpush1.xpose.msra.mxu0 0.0
    %170 = vmatprep.subr.mxu0 0.0
    %171 = vmatpush1.xpose.msra.mxu0 0.0
    %172 = vmatprep.subr.mxu0 0.0
    %173 = vmatpush1.xpose.msra.mxu0 0.0
    %174 = vmatprep.subr.mxu0 0.0
    %175 = vmatpush1.xpose.msra.mxu0 0.0
    %176 = vmatprep.subr.mxu0 0.0
    %177 = vmatpush1.xpose.msra.mxu0 0.0
    %178 = vmatprep.subr.mxu0 0.0
    %179 = vmatpush1.xpose.msra.mxu0 0.0
    %180 = vmatprep.subr.mxu0 0.0
    %181 = vmatpush1.xpose.msra.mxu0 0.0
    %182 = vmatprep.subr.mxu0 0.0
    %183 = vmatpush1.xpose.msra.mxu0 0.0
    %184 = vmatprep.subr.mxu0 0.0
    %185 = vmatpush1.xpose.msra.mxu0 0.0
    %186 = vmatprep.subr.mxu0 0.0
    %187 = vmatpush1.xpose.msra.mxu0 0.0
    %188 = vmatprep.subr.mxu0 0.0
    %189 = vmatpush1.xpose.msra.mxu0 0.0
    %190 = vmatprep.subr.mxu0 0.0
    %191 = vmatpush1.xpose.msra.mxu0 0.0
    %192 = vmatprep.subr.mxu0 0.0
    %193 = vmatpush1.xpose.msra.mxu0 0.0
    %194 = vmatprep.subr.mxu0 0.0
    %195 = vmatpush1.xpose.msra.mxu0 %v162
    %196 = vmatprep.subr.mxu0 0.0
    %197 = vmatpush2.xpose.msra.mxu0 0.0
    %198 = vmatprep.subr.mxu0 0.0
    %199 = vmatpush2.xpose.msra.mxu0 0.0
    %200 = vmatprep.subr.mxu0 0.0
    %201 = vmatpush2.xpose.msra.mxu0 0.0
    %202 = vmatprep.subr.mxu0 0.0
    %203 = vmatpush2.xpose.msra.mxu0 0.0
    %204 = vmatprep.subr.mxu0 0.0
    %205 = vmatpush2.xpose.msra.mxu0 0.0
    %206 = vmatprep.subr.mxu0 0.0
    %207 = vmatpush2.xpose.msra.mxu0 0.0
    %208 = vmatprep.subr.mxu0 0.0
    %209 = vmatpush2.xpose.msra.mxu0 0.0
    %210 = vmatprep.subr.mxu0 0.0
    %211 = vmatpush2.xpose.msra.mxu0 0.0
    %212 = vmatprep.subr.mxu0 0.0
    %213 = vmatpush2.xpose.msra.mxu0 0.0
    %214 = vmatprep.subr.mxu0 0.0
    %215 = vmatpush2.xpose.msra.mxu0 0.0
    %216 = vmatprep.subr.mxu0 0.0
    %217 = vmatpush2.xpose.msra.mxu0 0.0
    %218 = vmatprep.subr.mxu0 0.0
    %219 = vmatpush2.xpose.msra.mxu0 0.0
    %220 = vmatprep.subr.mxu0 0.0
    %221 = vmatpush2.xpose.msra.mxu0 0.0
    %222 = vmatprep.subr.mxu0 0.0
    %223 = vmatpush2.xpose.msra.mxu0 0.0
    %224 = vmatprep.subr.mxu0 0.0
    %225 = vmatpush2.xpose.msra.mxu0 0.0
    %226 = vmatprep.subr.mxu0 0.0
    %227 = vmatpush2.xpose.msra.mxu0 0.0
    %228 = vmatprep.mubr.f32.mxu0 0.0
    %229 = vmatmul.mubr.f32.gmra.mxu0 %v160
    %v230 = vpop.f32.mrf.mxu0
    %v231 = vadd.f32 0.0, %v230
    %v232 = vpop.f32.mrf.mxu0
    %233 = vdwg.mxu0
    %235 = vrot.lane.b32.xlu0 %v153, 96
    %v236 = vpop.permute.xlu0 %235
    %v237 = vsel %vm159, %v153, 0
    %v239 = vsel %vm159, %v236, 0
    %241 = vmatprep.subr.mxu0 0.0
    %242 = vmatpush1.xpose.msra.mxu0 0.0
    %243 = vmatprep.subr.mxu0 0.0
    %244 = vmatpush1.xpose.msra.mxu0 0.0
    %245 = vmatprep.subr.mxu0 0.0
    %246 = vmatpush1.xpose.msra.mxu0 0.0
    %247 = vmatprep.subr.mxu0 0.0
    %248 = vmatpush1.xpose.msra.mxu0 0.0
    %249 = vmatprep.subr.mxu0 0.0
    %250 = vmatpush1.xpose.msra.mxu0 0.0
    %251 = vmatprep.subr.mxu0 0.0
    %252 = vmatpush1.xpose.msra.mxu0 0.0
    %253 = vmatprep.subr.mxu0 0.0
    %254 = vmatpush1.xpose.msra.mxu0 0.0
    %255 = vmatprep.subr.mxu0 0.0
    %256 = vmatpush1.xpose.msra.mxu0 0.0
    %257 = vmatprep.subr.mxu0 0.0
    %258 = vmatpush1.xpose.msra.mxu0 0.0
    %259 = vmatprep.subr.mxu0 0.0
    %260 = vmatpush1.xpose.msra.mxu0 0.0
    %261 = vmatprep.subr.mxu0 0.0
    %262 = vmatpush1.xpose.msra.mxu0 0.0
    %263 = vmatprep.subr.mxu0 0.0
    %264 = vmatpush1.xpose.msra.mxu0 0.0
    %265 = vmatprep.subr.mxu0 0.0
    %266 = vmatpush1.xpose.msra.mxu0 0.0
    %267 = vmatprep.subr.mxu0 0.0
    %268 = vmatpush1.xpose.msra.mxu0 0.0
    %269 = vmatprep.subr.mxu0 0.0
    %270 = vmatpush1.xpose.msra.mxu0 0.0
    %271 = vmatprep.subr.mxu0 0.0
    %272 = vmatpush1.xpose.msra.mxu0 %v239
    %273 = vmatprep.subr.mxu0 0.0
    %274 = vmatpush2.xpose.msra.mxu0 0.0
    %275 = vmatprep.subr.mxu0 0.0
    %276 = vmatpush2.xpose.msra.mxu0 0.0
    %277 = vmatprep.subr.mxu0 0.0
    %278 = vmatpush2.xpose.msra.mxu0 0.0
    %279 = vmatprep.subr.mxu0 0.0
    %280 = vmatpush2.xpose.msra.mxu0 0.0
    %281 = vmatprep.subr.mxu0 0.0
    %282 = vmatpush2.xpose.msra.mxu0 0.0
    %283 = vmatprep.subr.mxu0 0.0
    %284 = vmatpush2.xpose.msra.mxu0 0.0
    %285 = vmatprep.subr.mxu0 0.0
    %286 = vmatpush2.xpose.msra.mxu0 0.0
    %287 = vmatprep.subr.mxu0 0.0
    %288 = vmatpush2.xpose.msra.mxu0 0.0
    %289 = vmatprep.subr.mxu0 0.0
    %290 = vmatpush2.xpose.msra.mxu0 0.0
    %291 = vmatprep.subr.mxu0 0.0
    %292 = vmatpush2.xpose.msra.mxu0 0.0
    %293 = vmatprep.subr.mxu0 0.0
    %294 = vmatpush2.xpose.msra.mxu0 0.0
    %295 = vmatprep.subr.mxu0 0.0
    %296 = vmatpush2.xpose.msra.mxu0 0.0
    %297 = vmatprep.subr.mxu0 0.0
    %298 = vmatpush2.xpose.msra.mxu0 0.0
    %299 = vmatprep.subr.mxu0 0.0
    %300 = vmatpush2.xpose.msra.mxu0 0.0
    %301 = vmatprep.subr.mxu0 0.0
    %302 = vmatpush2.xpose.msra.mxu0 0.0
    %303 = vmatprep.subr.mxu0 0.0
    %304 = vmatpush2.xpose.msra.mxu0 0.0
    %305 = vmatprep.mubr.f32.mxu0 0.0
    %306 = vmatmul.mubr.f32.gmra.mxu0 %v237
    %v307 = vpop.f32.mrf.mxu0
    %v308 = vadd.f32 0.0, %v307
    %v309 = vpop.f32.mrf.mxu0
    %310 = vdwg.mxu0
    %v311 = vsel %vm159, %v231, -inf
    %312 = vmax.xlane.f32.xlu0 %v311
    %v313 = vpop.xlane.xlu0 %312
    %v314 = vsel %vm159, %v308, -inf
    %315 = vmax.xlane.f32.xlu0 %v314
    %v316 = vpop.xlane.xlu0 %315
    %v317 = vsub.f32 %v231, %v313
    %v318 = vsub.f32 %v308, %v316
    %v319 = vmul.f32 %v317, 1.442695
    %v320 = vpow.pop %v319
    %v321 = vmul.f32 %v318, 1.442695
    %v322 = vpow.pop %v321
    %v323 = vsel %vm159, %v320, 0.0
    %324 = vadd.xlane.f32.xlu0 %v323
    %v325 = vpop.xlane.xlu0 %324
    %v326 = vsel %vm159, %v322, 0.0
    %327 = vadd.xlane.f32.xlu0 %v326
    %v328 = vpop.xlane.xlu0 %327
    %v329 = vrcp.pop %v325
    %v330 = vrcp.pop %v328
    %v331 = vmul.f32 %v320, %v329
    %v332 = vmul.f32 %v322, %v330
    %333 = vrot.lane.b32.xlu0 %v148, 64
    %v334 = vpop.permute.xlu0 %333
    %v337 = vsel %vm159, %v331, 0
    %339 = vmatprep.subr.mxu0 0.0
    %340 = vmatpush1.msra.mxu0 0.0
    %341 = vmatprep.subr.mxu0 0.0
    %342 = vmatpush1.msra.mxu0 0.0
    %343 = vmatprep.subr.mxu0 0.0
    %344 = vmatpush1.msra.mxu0 0.0
    %345 = vmatprep.subr.mxu0 0.0
    %346 = vmatpush1.msra.mxu0 0.0
    %347 = vmatprep.subr.mxu0 0.0
    %348 = vmatpush1.msra.mxu0 0.0
    %349 = vmatprep.subr.mxu0 0.0
    %350 = vmatpush1.msra.mxu0 0.0
    %351 = vmatprep.subr.mxu0 0.0
    %352 = vmatpush1.msra.mxu0 0.0
    %353 = vmatprep.subr.mxu0 0.0
    %354 = vmatpush1.msra.mxu0 0.0
    %355 = vmatprep.subr.mxu0 0.0
    %356 = vmatpush1.msra.mxu0 0.0
    %357 = vmatprep.subr.mxu0 0.0
    %358 = vmatpush1.msra.mxu0 0.0
    %359 = vmatprep.subr.mxu0 0.0
    %360 = vmatpush1.msra.mxu0 0.0
    %361 = vmatprep.subr.mxu0 0.0
    %362 = vmatpush1.msra.mxu0 0.0
    %363 = vmatprep.subr.mxu0 0.0
    %364 = vmatpush1.msra.mxu0 0.0
    %365 = vmatprep.subr.mxu0 0.0
    %366 = vmatpush1.msra.mxu0 0.0
    %367 = vmatprep.subr.mxu0 0.0
    %368 = vmatpush1.msra.mxu0 0.0
    %369 = vmatprep.subr.mxu0 0.0
    %370 = vmatpush1.msra.mxu0 %v334
    %371 = vmatprep.subr.mxu0 0.0
    %372 = vmatpush2.msra.mxu0 0.0
    %373 = vmatprep.subr.mxu0 0.0
    %374 = vmatpush2.msra.mxu0 0.0
    %375 = vmatprep.subr.mxu0 0.0
    %376 = vmatpush2.msra.mxu0 0.0
    %377 = vmatprep.subr.mxu0 0.0
    %378 = vmatpush2.msra.mxu0 0.0
    %379 = vmatprep.subr.mxu0 0.0
    %380 = vmatpush2.msra.mxu0 0.0
    %381 = vmatprep.subr.mxu0 0.0
    %382 = vmatpush2.msra.mxu0 0.0
    %383 = vmatprep.subr.mxu0 0.0
    %384 = vmatpush2.msra.mxu0 0.0
    %385 = vmatprep.subr.mxu0 0.0
    %386 = vmatpush2.msra.mxu0 0.0
    %387 = vmatprep.subr.mxu0 0.0
    %388 = vmatpush2.msra.mxu0 0.0
    %389 = vmatprep.subr.mxu0 0.0
    %390 = vmatpush2.msra.mxu0 0.0
    %391 = vmatprep.subr.mxu0 0.0
    %392 = vmatpush2.msra.mxu0 0.0
    %393 = vmatprep.subr.mxu0 0.0
    %394 = vmatpush2.msra.mxu0 0.0
    %395 = vmatprep.subr.mxu0 0.0
    %396 = vmatpush2.msra.mxu0 0.0
    %397 = vmatprep.subr.mxu0 0.0
    %398 = vmatpush2.msra.mxu0 0.0
    %399 = vmatprep.subr.mxu0 0.0
    %400 = vmatpush2.msra.mxu0 0.0
    %401 = vmatprep.subr.mxu0 0.0
    %402 = vmatpush2.msra.mxu0 0.0
    %403 = vmatprep.mubr.f32.mxu0 0.0
    %404 = vmatmul.mubr.f32.gmra.mxu0 %v337
    %v405 = vpop.f32.mrf.mxu0
    %v406 = vadd.f32 0.0, %v405
    %v407 = vpop.f32.mrf.mxu0
    %408 = vdwg.mxu0
    %409 = vrot.lane.b32.xlu0 %v153, 64
    %v410 = vpop.permute.xlu0 %409
    %v413 = vsel %vm159, %v332, 0
    %415 = vmatprep.subr.mxu0 0.0
    %416 = vmatpush1.msra.mxu0 0.0
    %417 = vmatprep.subr.mxu0 0.0
    %418 = vmatpush1.msra.mxu0 0.0
    %419 = vmatprep.subr.mxu0 0.0
    %420 = vmatpush1.msra.mxu0 0.0
    %421 = vmatprep.subr.mxu0 0.0
    %422 = vmatpush1.msra.mxu0 0.0
    %423 = vmatprep.subr.mxu0 0.0
    %424 = vmatpush1.msra.mxu0 0.0
    %425 = vmatprep.subr.mxu0 0.0
    %426 = vmatpush1.msra.mxu0 0.0
    %427 = vmatprep.subr.mxu0 0.0
    %428 = vmatpush1.msra.mxu0 0.0
    %429 = vmatprep.subr.mxu0 0.0
    %430 = vmatpush1.msra.mxu0 0.0
    %431 = vmatprep.subr.mxu0 0.0
    %432 = vmatpush1.msra.mxu0 0.0
    %433 = vmatprep.subr.mxu0 0.0
    %434 = vmatpush1.msra.mxu0 0.0
    %435 = vmatprep.subr.mxu0 0.0
    %436 = vmatpush1.msra.mxu0 0.0
    %437 = vmatprep.subr.mxu0 0.0
    %438 = vmatpush1.msra.mxu0 0.0
    %439 = vmatprep.subr.mxu0 0.0
    %440 = vmatpush1.msra.mxu0 0.0
    %441 = vmatprep.subr.mxu0 0.0
    %442 = vmatpush1.msra.mxu0 0.0
    %443 = vmatprep.subr.mxu0 0.0
    %444 = vmatpush1.msra.mxu0 0.0
    %445 = vmatprep.subr.mxu0 0.0
    %446 = vmatpush1.msra.mxu0 %v410
    %447 = vmatprep.subr.mxu0 0.0
    %448 = vmatpush2.msra.mxu0 0.0
    %449 = vmatprep.subr.mxu0 0.0
    %450 = vmatpush2.msra.mxu0 0.0
    %451 = vmatprep.subr.mxu0 0.0
    %452 = vmatpush2.msra.mxu0 0.0
    %453 = vmatprep.subr.mxu0 0.0
    %454 = vmatpush2.msra.mxu0 0.0
    %455 = vmatprep.subr.mxu0 0.0
    %456 = vmatpush2.msra.mxu0 0.0
    %457 = vmatprep.subr.mxu0 0.0
    %458 = vmatpush2.msra.mxu0 0.0
    %459 = vmatprep.subr.mxu0 0.0
    %460 = vmatpush2.msra.mxu0 0.0
    %461 = vmatprep.subr.mxu0 0.0
    %462 = vmatpush2.msra.mxu0 0.0
    %463 = vmatprep.subr.mxu0 0.0
    %464 = vmatpush2.msra.mxu0 0.0
    %465 = vmatprep.subr.mxu0 0.0
    %466 = vmatpush2.msra.mxu0 0.0
    %467 = vmatprep.subr.mxu0 0.0
    %468 = vmatpush2.msra.mxu0 0.0
    %469 = vmatprep.subr.mxu0 0.0
    %470 = vmatpush2.msra.mxu0 0.0
    %471 = vmatprep.subr.mxu0 0.0
    %472 = vmatpush2.msra.mxu0 0.0
    %473 = vmatprep.subr.mxu0 0.0
    %474 = vmatpush2.msra.mxu0 0.0
    %475 = vmatprep.subr.mxu0 0.0
    %476 = vmatpush2.msra.mxu0 0.0
    %477 = vmatprep.subr.mxu0 0.0
    %478 = vmatpush2.msra.mxu0 0.0
    %479 = vmatprep.mubr.f32.mxu0 0.0
    %480 = vmatmul.mubr.f32.gmra.mxu0 %v413
    %v481 = vpop.f32.mrf.mxu0
    %v482 = vadd.f32 0.0, %v481
    %v483 = vpop.f32.mrf.mxu0
    %484 = vdwg.mxu0
    %v485 = vld [vmem:[%s3] sm:$0xff]
    %486 = vrot.lane.b32.xlu0 %v148, 120
    %v487 = vpop.permute.xlu0 %486
    %488 = vrot.lane.b32.xlu0 %v148, 88
    %v489 = vpop.permute.xlu0 %488
    %v490 = vsel %vm159, %v487, 0
    %v492 = vsel %vm159, %v489, 0
    %494 = vmatprep.subr.mxu0 0.0
    %495 = vmatpush1.xpose.msra.mxu0 0.0
    %496 = vmatprep.subr.mxu0 0.0
    %497 = vmatpush1.xpose.msra.mxu0 0.0
    %498 = vmatprep.subr.mxu0 0.0
    %499 = vmatpush1.xpose.msra.mxu0 0.0
    %500 = vmatprep.subr.mxu0 0.0
    %501 = vmatpush1.xpose.msra.mxu0 0.0
    %502 = vmatprep.subr.mxu0 0.0
    %503 = vmatpush1.xpose.msra.mxu0 0.0
    %504 = vmatprep.subr.mxu0 0.0
    %505 = vmatpush1.xpose.msra.mxu0 0.0
    %506 = vmatprep.subr.mxu0 0.0
    %507 = vmatpush1.xpose.msra.mxu0 0.0
    %508 = vmatprep.subr.mxu0 0.0
    %509 = vmatpush1.xpose.msra.mxu0 0.0
    %510 = vmatprep.subr.mxu0 0.0
    %511 = vmatpush1.xpose.msra.mxu0 0.0
    %512 = vmatprep.subr.mxu0 0.0
    %513 = vmatpush1.xpose.msra.mxu0 0.0
    %514 = vmatprep.subr.mxu0 0.0
    %515 = vmatpush1.xpose.msra.mxu0 0.0
    %516 = vmatprep.subr.mxu0 0.0
    %517 = vmatpush1.xpose.msra.mxu0 0.0
    %518 = vmatprep.subr.mxu0 0.0
    %519 = vmatpush1.xpose.msra.mxu0 0.0
    %520 = vmatprep.subr.mxu0 0.0
    %521 = vmatpush1.xpose.msra.mxu0 0.0
    %522 = vmatprep.subr.mxu0 0.0
    %523 = vmatpush1.xpose.msra.mxu0 0.0
    %524 = vmatprep.subr.mxu0 0.0
    %525 = vmatpush1.xpose.msra.mxu0 %v492
    %526 = vmatprep.subr.mxu0 0.0
    %527 = vmatpush2.xpose.msra.mxu0 0.0
    %528 = vmatprep.subr.mxu0 0.0
    %529 = vmatpush2.xpose.msra.mxu0 0.0
    %530 = vmatprep.subr.mxu0 0.0
    %531 = vmatpush2.xpose.msra.mxu0 0.0
    %532 = vmatprep.subr.mxu0 0.0
    %533 = vmatpush2.xpose.msra.mxu0 0.0
    %534 = vmatprep.subr.mxu0 0.0
    %535 = vmatpush2.xpose.msra.mxu0 0.0
    %536 = vmatprep.subr.mxu0 0.0
    %537 = vmatpush2.xpose.msra.mxu0 0.0
    %538 = vmatprep.subr.mxu0 0.0
    %539 = vmatpush2.xpose.msra.mxu0 0.0
    %540 = vmatprep.subr.mxu0 0.0
    %541 = vmatpush2.xpose.msra.mxu0 0.0
    %542 = vmatprep.subr.mxu0 0.0
    %543 = vmatpush2.xpose.msra.mxu0 0.0
    %544 = vmatprep.subr.mxu0 0.0
    %545 = vmatpush2.xpose.msra.mxu0 0.0
    %546 = vmatprep.subr.mxu0 0.0
    %547 = vmatpush2.xpose.msra.mxu0 0.0
    %548 = vmatprep.subr.mxu0 0.0
    %549 = vmatpush2.xpose.msra.mxu0 0.0
    %550 = vmatprep.subr.mxu0 0.0
    %551 = vmatpush2.xpose.msra.mxu0 0.0
    %552 = vmatprep.subr.mxu0 0.0
    %553 = vmatpush2.xpose.msra.mxu0 0.0
    %554 = vmatprep.subr.mxu0 0.0
    %555 = vmatpush2.xpose.msra.mxu0 0.0
    %556 = vmatprep.subr.mxu0 0.0
    %557 = vmatpush2.xpose.msra.mxu0 0.0
    %558 = vmatprep.mubr.f32.mxu0 0.0
    %559 = vmatmul.mubr.f32.gmra.mxu0 %v490
    %v560 = vpop.f32.mrf.mxu0
    %v561 = vadd.f32 0.0, %v560
    %v562 = vpop.f32.mrf.mxu0
    %563 = vdwg.mxu0
    %564 = vrot.lane.b32.xlu0 %v153, 120
    %v565 = vpop.permute.xlu0 %564
    %566 = vrot.lane.b32.xlu0 %v153, 88
    %v567 = vpop.permute.xlu0 %566
    %v568 = vsel %vm159, %v565, 0
    %v570 = vsel %vm159, %v567, 0
    %572 = vmatprep.subr.mxu0 0.0
    %573 = vmatpush1.xpose.msra.mxu0 0.0
    %574 = vmatprep.subr.mxu0 0.0
    %575 = vmatpush1.xpose.msra.mxu0 0.0
    %576 = vmatprep.subr.mxu0 0.0
    %577 = vmatpush1.xpose.msra.mxu0 0.0
    %578 = vmatprep.subr.mxu0 0.0
    %579 = vmatpush1.xpose.msra.mxu0 0.0
    %580 = vmatprep.subr.mxu0 0.0
    %581 = vmatpush1.xpose.msra.mxu0 0.0
    %582 = vmatprep.subr.mxu0 0.0
    %583 = vmatpush1.xpose.msra.mxu0 0.0
    %584 = vmatprep.subr.mxu0 0.0
    %585 = vmatpush1.xpose.msra.mxu0 0.0
    %586 = vmatprep.subr.mxu0 0.0
    %587 = vmatpush1.xpose.msra.mxu0 0.0
    %588 = vmatprep.subr.mxu0 0.0
    %589 = vmatpush1.xpose.msra.mxu0 0.0
    %590 = vmatprep.subr.mxu0 0.0
    %591 = vmatpush1.xpose.msra.mxu0 0.0
    %592 = vmatprep.subr.mxu0 0.0
    %593 = vmatpush1.xpose.msra.mxu0 0.0
    %594 = vmatprep.subr.mxu0 0.0
    %595 = vmatpush1.xpose.msra.mxu0 0.0
    %596 = vmatprep.subr.mxu0 0.0
    %597 = vmatpush1.xpose.msra.mxu0 0.0
    %598 = vmatprep.subr.mxu0 0.0
    %599 = vmatpush1.xpose.msra.mxu0 0.0
    %600 = vmatprep.subr.mxu0 0.0
    %601 = vmatpush1.xpose.msra.mxu0 0.0
    %602 = vmatprep.subr.mxu0 0.0
    %603 = vmatpush1.xpose.msra.mxu0 %v570
    %604 = vmatprep.subr.mxu0 0.0
    %605 = vmatpush2.xpose.msra.mxu0 0.0
    %606 = vmatprep.subr.mxu0 0.0
    %607 = vmatpush2.xpose.msra.mxu0 0.0
    %608 = vmatprep.subr.mxu0 0.0
    %609 = vmatpush2.xpose.msra.mxu0 0.0
    %610 = vmatprep.subr.mxu0 0.0
    %611 = vmatpush2.xpose.msra.mxu0 0.0
    %612 = vmatprep.subr.mxu0 0.0
    %613 = vmatpush2.xpose.msra.mxu0 0.0
    %614 = vmatprep.subr.mxu0 0.0
    %615 = vmatpush2.xpose.msra.mxu0 0.0
    %616 = vmatprep.subr.mxu0 0.0
    %617 = vmatpush2.xpose.msra.mxu0 0.0
    %618 = vmatprep.subr.mxu0 0.0
    %619 = vmatpush2.xpose.msra.mxu0 0.0
    %620 = vmatprep.subr.mxu0 0.0
    %621 = vmatpush2.xpose.msra.mxu0 0.0
    %622 = vmatprep.subr.mxu0 0.0
    %623 = vmatpush2.xpose.msra.mxu0 0.0
    %624 = vmatprep.subr.mxu0 0.0
    %625 = vmatpush2.xpose.msra.mxu0 0.0
    %626 = vmatprep.subr.mxu0 0.0
    %627 = vmatpush2.xpose.msra.mxu0 0.0
    %628 = vmatprep.subr.mxu0 0.0
    %629 = vmatpush2.xpose.msra.mxu0 0.0
    %630 = vmatprep.subr.mxu0 0.0
    %631 = vmatpush2.xpose.msra.mxu0 0.0
    %632 = vmatprep.subr.mxu0 0.0
    %633 = vmatpush2.xpose.msra.mxu0 0.0
    %634 = vmatprep.subr.mxu0 0.0
    %635 = vmatpush2.xpose.msra.mxu0 0.0
    %636 = vmatprep.mubr.f32.mxu0 0.0
    %637 = vmatmul.mubr.f32.gmra.mxu0 %v568
    %v638 = vpop.f32.mrf.mxu0
    %v639 = vadd.f32 0.0, %v638
    %v640 = vpop.f32.mrf.mxu0
    %641 = vdwg.mxu0
    %v642 = vsel %vm159, %v561, -inf
    %643 = vmax.xlane.f32.xlu0 %v642
    %v644 = vpop.xlane.xlu0 %643
    %v645 = vsel %vm159, %v639, -inf
    %646 = vmax.xlane.f32.xlu0 %v645
    %v647 = vpop.xlane.xlu0 %646
    %v648 = vsub.f32 %v561, %v644
    %v649 = vsub.f32 %v639, %v647
    %v650 = vmul.f32 %v648, 1.442695
    %v651 = vpow.pop %v650
    %v652 = vmul.f32 %v649, 1.442695
    %v653 = vpow.pop %v652
    %v654 = vsel %vm159, %v651, 0.0
    %655 = vadd.xlane.f32.xlu0 %v654
    %v656 = vpop.xlane.xlu0 %655
    %v657 = vsel %vm159, %v653, 0.0
    %658 = vadd.xlane.f32.xlu0 %v657
    %v659 = vpop.xlane.xlu0 %658
    %v660 = vrcp.pop %v656
    %v661 = vrcp.pop %v659
    %v662 = vmul.f32 %v651, %v660
    %v663 = vmul.f32 %v653, %v661
    %664 = vrot.lane.b32.xlu0 %v148, 56
    %v665 = vpop.permute.xlu0 %664
    %v668 = vsel %vm159, %v662, 0
    %670 = vmatprep.subr.mxu0 0.0
    %671 = vmatpush1.msra.mxu0 0.0
    %672 = vmatprep.subr.mxu0 0.0
    %673 = vmatpush1.msra.mxu0 0.0
    %674 = vmatprep.subr.mxu0 0.0
    %675 = vmatpush1.msra.mxu0 0.0
    %676 = vmatprep.subr.mxu0 0.0
    %677 = vmatpush1.msra.mxu0 0.0
    %678 = vmatprep.subr.mxu0 0.0
    %679 = vmatpush1.msra.mxu0 0.0
    %680 = vmatprep.subr.mxu0 0.0
    %681 = vmatpush1.msra.mxu0 0.0
    %682 = vmatprep.subr.mxu0 0.0
    %683 = vmatpush1.msra.mxu0 0.0
    %684 = vmatprep.subr.mxu0 0.0
    %685 = vmatpush1.msra.mxu0 0.0
    %686 = vmatprep.subr.mxu0 0.0
    %687 = vmatpush1.msra.mxu0 0.0
    %688 = vmatprep.subr.mxu0 0.0
    %689 = vmatpush1.msra.mxu0 0.0
    %690 = vmatprep.subr.mxu0 0.0
    %691 = vmatpush1.msra.mxu0 0.0
    %692 = vmatprep.subr.mxu0 0.0
    %693 = vmatpush1.msra.mxu0 0.0
    %694 = vmatprep.subr.mxu0 0.0
    %695 = vmatpush1.msra.mxu0 0.0
    %696 = vmatprep.subr.mxu0 0.0
    %697 = vmatpush1.msra.mxu0 0.0
    %698 = vmatprep.subr.mxu0 0.0
    %699 = vmatpush1.msra.mxu0 0.0
    %700 = vmatprep.subr.mxu0 0.0
    %701 = vmatpush1.msra.mxu0 %v665
    %702 = vmatprep.subr.mxu0 0.0
    %703 = vmatpush2.msra.mxu0 0.0
    %704 = vmatprep.subr.mxu0 0.0
    %705 = vmatpush2.msra.mxu0 0.0
    %706 = vmatprep.subr.mxu0 0.0
    %707 = vmatpush2.msra.mxu0 0.0
    %708 = vmatprep.subr.mxu0 0.0
    %709 = vmatpush2.msra.mxu0 0.0
    %710 = vmatprep.subr.mxu0 0.0
    %711 = vmatpush2.msra.mxu0 0.0
    %712 = vmatprep.subr.mxu0 0.0
    %713 = vmatpush2.msra.mxu0 0.0
    %714 = vmatprep.subr.mxu0 0.0
    %715 = vmatpush2.msra.mxu0 0.0
    %716 = vmatprep.subr.mxu0 0.0
    %717 = vmatpush2.msra.mxu0 0.0
    %718 = vmatprep.subr.mxu0 0.0
    %719 = vmatpush2.msra.mxu0 0.0
    %720 = vmatprep.subr.mxu0 0.0
    %721 = vmatpush2.msra.mxu0 0.0
    %722 = vmatprep.subr.mxu0 0.0
    %723 = vmatpush2.msra.mxu0 0.0
    %724 = vmatprep.subr.mxu0 0.0
    %725 = vmatpush2.msra.mxu0 0.0
    %726 = vmatprep.subr.mxu0 0.0
    %727 = vmatpush2.msra.mxu0 0.0
    %728 = vmatprep.subr.mxu0 0.0
    %729 = vmatpush2.msra.mxu0 0.0
    %730 = vmatprep.subr.mxu0 0.0
    %731 = vmatpush2.msra.mxu0 0.0
    %732 = vmatprep.subr.mxu0 0.0
    %733 = vmatpush2.msra.mxu0 0.0
    %734 = vmatprep.mubr.f32.mxu0 0.0
    %735 = vmatmul.mubr.f32.gmra.mxu0 %v668
    %v736 = vpop.f32.mrf.mxu0
    %v737 = vadd.f32 0.0, %v736
    %v738 = vpop.f32.mrf.mxu0
    %739 = vdwg.mxu0
    %740 = vrot.lane.b32.xlu0 %v153, 56
    %v741 = vpop.permute.xlu0 %740
    %v744 = vsel %vm159, %v663, 0
    %746 = vmatprep.subr.mxu0 0.0
    %747 = vmatpush1.msra.mxu0 0.0
    %748 = vmatprep.subr.mxu0 0.0
    %749 = vmatpush1.msra.mxu0 0.0
    %750 = vmatprep.subr.mxu0 0.0
    %751 = vmatpush1.msra.mxu0 0.0
    %752 = vmatprep.subr.mxu0 0.0
    %753 = vmatpush1.msra.mxu0 0.0
    %754 = vmatprep.subr.mxu0 0.0
    %755 = vmatpush1.msra.mxu0 0.0
    %756 = vmatprep.subr.mxu0 0.0
    %757 = vmatpush1.msra.mxu0 0.0
    %758 = vmatprep.subr.mxu0 0.0
    %759 = vmatpush1.msra.mxu0 0.0
    %760 = vmatprep.subr.mxu0 0.0
    %761 = vmatpush1.msra.mxu0 0.0
    %762 = vmatprep.subr.mxu0 0.0
    %763 = vmatpush1.msra.mxu0 0.0
    %764 = vmatprep.subr.mxu0 0.0
    %765 = vmatpush1.msra.mxu0 0.0
    %766 = vmatprep.subr.mxu0 0.0
    %767 = vmatpush1.msra.mxu0 0.0
    %768 = vmatprep.subr.mxu0 0.0
    %769 = vmatpush1.msra.mxu0 0.0
    %770 = vmatprep.subr.mxu0 0.0
    %771 = vmatpush1.msra.mxu0 0.0
    %772 = vmatprep.subr.mxu0 0.0
    %773 = vmatpush1.msra.mxu0 0.0
    %774 = vmatprep.subr.mxu0 0.0
    %775 = vmatpush1.msra.mxu0 0.0
    %776 = vmatprep.subr.mxu0 0.0
    %777 = vmatpush1.msra.mxu0 %v741
    %778 = vmatprep.subr.mxu0 0.0
    %779 = vmatpush2.msra.mxu0 0.0
    %780 = vmatprep.subr.mxu0 0.0
    %781 = vmatpush2.msra.mxu0 0.0
    %782 = vmatprep.subr.mxu0 0.0
    %783 = vmatpush2.msra.mxu0 0.0
    %784 = vmatprep.subr.mxu0 0.0
    %785 = vmatpush2.msra.mxu0 0.0
    %786 = vmatprep.subr.mxu0 0.0
    %787 = vmatpush2.msra.mxu0 0.0
    %788 = vmatprep.subr.mxu0 0.0
    %789 = vmatpush2.msra.mxu0 0.0
    %790 = vmatprep.subr.mxu0 0.0
    %791 = vmatpush2.msra.mxu0 0.0
    %792 = vmatprep.subr.mxu0 0.0
    %793 = vmatpush2.msra.mxu0 0.0
    %794 = vmatprep.subr.mxu0 0.0
    %795 = vmatpush2.msra.mxu0 0.0
    %796 = vmatprep.subr.mxu0 0.0
    %797 = vmatpush2.msra.mxu0 0.0
    %798 = vmatprep.subr.mxu0 0.0
    %799 = vmatpush2.msra.mxu0 0.0
    %800 = vmatprep.subr.mxu0 0.0
    %801 = vmatpush2.msra.mxu0 0.0
    %802 = vmatprep.subr.mxu0 0.0
    %803 = vmatpush2.msra.mxu0 0.0
    %804 = vmatprep.subr.mxu0 0.0
    %805 = vmatpush2.msra.mxu0 0.0
    %806 = vmatprep.subr.mxu0 0.0
    %807 = vmatpush2.msra.mxu0 0.0
    %808 = vmatprep.subr.mxu0 0.0
    %809 = vmatpush2.msra.mxu0 0.0
    %810 = vmatprep.mubr.f32.mxu0 0.0
    %811 = vmatmul.mubr.f32.gmra.mxu0 %v744
    %v812 = vpop.f32.mrf.mxu0
    %v813 = vadd.f32 0.0, %v812
    %v814 = vpop.f32.mrf.mxu0
    %815 = vdwg.mxu0
    %s816 = scalar_lea.vmem %s3, 8
    %v817 = vld [vmem:[%s816] sm:$0xff]
    %v819 = vsel %vm159, %v737, 0
    %v822 = vsel %vm159, %v813, 0
    %824 = vmatprep.subr.mxu0 0.0
    %825 = vmatpush1.msra.mxu0 0.0
    %826 = vmatprep.subr.mxu0 0.0
    %827 = vmatpush1.msra.mxu0 0.0
    %828 = vmatprep.subr.mxu0 0.0
    %829 = vmatpush1.msra.mxu0 0.0
    %830 = vmatprep.subr.mxu0 0.0
    %831 = vmatpush1.msra.mxu0 0.0
    %832 = vmatprep.subr.mxu0 0.0
    %833 = vmatpush1.msra.mxu0 0.0
    %834 = vmatprep.subr.mxu0 0.0
    %835 = vmatpush1.msra.mxu0 0.0
    %836 = vmatprep.subr.mxu0 0.0
    %837 = vmatpush1.msra.mxu0 0.0
    %838 = vmatprep.subr.mxu0 0.0
    %839 = vmatpush1.msra.mxu0 0.0
    %840 = vmatprep.subr.mxu0 0.0
    %841 = vmatpush1.msra.mxu0 0.0
    %842 = vmatprep.subr.mxu0 0.0
    %843 = vmatpush1.msra.mxu0 0.0
    %844 = vmatprep.subr.mxu0 0.0
    %845 = vmatpush1.msra.mxu0 0.0
    %846 = vmatprep.subr.mxu0 0.0
    %847 = vmatpush1.msra.mxu0 0.0
    %848 = vmatprep.subr.mxu0 0.0
    %849 = vmatpush1.msra.mxu0 0.0
    %850 = vmatprep.subr.mxu0 0.0
    %851 = vmatpush1.msra.mxu0 0.0
    %852 = vmatprep.subr.mxu0 0.0
    %853 = vmatpush1.msra.mxu0 0.0
    %854 = vmatprep.subr.mxu0 0.0
    %855 = vmatpush1.msra.mxu0 %v817
    %856 = vmatprep.subr.mxu0 0.0
    %857 = vmatpush2.msra.mxu0 0.0
    %858 = vmatprep.subr.mxu0 0.0
    %859 = vmatpush2.msra.mxu0 0.0
    %860 = vmatprep.subr.mxu0 0.0
    %861 = vmatpush2.msra.mxu0 0.0
    %862 = vmatprep.subr.mxu0 0.0
    %863 = vmatpush2.msra.mxu0 0.0
    %864 = vmatprep.subr.mxu0 0.0
    %865 = vmatpush2.msra.mxu0 0.0
    %866 = vmatprep.subr.mxu0 0.0
    %867 = vmatpush2.msra.mxu0 0.0
    %868 = vmatprep.subr.mxu0 0.0
    %869 = vmatpush2.msra.mxu0 0.0
    %870 = vmatprep.subr.mxu0 0.0
    %871 = vmatpush2.msra.mxu0 0.0
    %872 = vmatprep.subr.mxu0 0.0
    %873 = vmatpush2.msra.mxu0 0.0
    %874 = vmatprep.subr.mxu0 0.0
    %875 = vmatpush2.msra.mxu0 0.0
    %876 = vmatprep.subr.mxu0 0.0
    %877 = vmatpush2.msra.mxu0 0.0
    %878 = vmatprep.subr.mxu0 0.0
    %879 = vmatpush2.msra.mxu0 0.0
    %880 = vmatprep.subr.mxu0 0.0
    %881 = vmatpush2.msra.mxu0 0.0
    %882 = vmatprep.subr.mxu0 0.0
    %883 = vmatpush2.msra.mxu0 0.0
    %884 = vmatprep.subr.mxu0 0.0
    %885 = vmatpush2.msra.mxu0 0.0
    %886 = vmatprep.subr.mxu0 0.0
    %887 = vmatpush2.msra.mxu0 0.0
    %888 = vmatprep.mubr.f32.mxu0 0.0
    %889 = vmatmul.mubr.f32.gmra.mxu0 %v819
    %v890 = vpop.f32.mrf.mxu0
    %v891 = vadd.f32 0.0, %v890
    %v892 = vpop.f32.mrf.mxu0
    %893 = vmatprep.mubr.f32.mxu0 0.0
    %894 = vmatmul.mubr.f32.gmra.mxu0 %v822
    %v895 = vpop.f32.mrf.mxu0
    %v896 = vadd.f32 0.0, %v895
    %v897 = vpop.f32.mrf.mxu0
    %898 = vdwg.mxu0
    %v900 = vsel %vm159, %v406, 0
    %v903 = vsel %vm159, %v482, 0
    %905 = vmatprep.subr.mxu0 0.0
    %906 = vmatpush1.msra.mxu0 0.0
    %907 = vmatprep.subr.mxu0 0.0
    %908 = vmatpush1.msra.mxu0 0.0
    %909 = vmatprep.subr.mxu0 0.0
    %910 = vmatpush1.msra.mxu0 0.0
    %911 = vmatprep.subr.mxu0 0.0
    %912 = vmatpush1.msra.mxu0 0.0
    %913 = vmatprep.subr.mxu0 0.0
    %914 = vmatpush1.msra.mxu0 0.0
    %915 = vmatprep.subr.mxu0 0.0
    %916 = vmatpush1.msra.mxu0 0.0
    %917 = vmatprep.subr.mxu0 0.0
    %918 = vmatpush1.msra.mxu0 0.0
    %919 = vmatprep.subr.mxu0 0.0
    %920 = vmatpush1.msra.mxu0 0.0
    %921 = vmatprep.subr.mxu0 0.0
    %922 = vmatpush1.msra.mxu0 0.0
    %923 = vmatprep.subr.mxu0 0.0
    %924 = vmatpush1.msra.mxu0 0.0
    %925 = vmatprep.subr.mxu0 0.0
    %926 = vmatpush1.msra.mxu0 0.0
    %927 = vmatprep.subr.mxu0 0.0
    %928 = vmatpush1.msra.mxu0 0.0
    %929 = vmatprep.subr.mxu0 0.0
    %930 = vmatpush1.msra.mxu0 0.0
    %931 = vmatprep.subr.mxu0 0.0
    %932 = vmatpush1.msra.mxu0 0.0
    %933 = vmatprep.subr.mxu0 0.0
    %934 = vmatpush1.msra.mxu0 0.0
    %935 = vmatprep.subr.mxu0 0.0
    %936 = vmatpush1.msra.mxu0 %v485
    %937 = vmatprep.subr.mxu0 0.0
    %938 = vmatpush2.msra.mxu0 0.0
    %939 = vmatprep.subr.mxu0 0.0
    %940 = vmatpush2.msra.mxu0 0.0
    %941 = vmatprep.subr.mxu0 0.0
    %942 = vmatpush2.msra.mxu0 0.0
    %943 = vmatprep.subr.mxu0 0.0
    %944 = vmatpush2.msra.mxu0 0.0
    %945 = vmatprep.subr.mxu0 0.0
    %946 = vmatpush2.msra.mxu0 0.0
    %947 = vmatprep.subr.mxu0 0.0
    %948 = vmatpush2.msra.mxu0 0.0
    %949 = vmatprep.subr.mxu0 0.0
    %950 = vmatpush2.msra.mxu0 0.0
    %951 = vmatprep.subr.mxu0 0.0
    %952 = vmatpush2.msra.mxu0 0.0
    %953 = vmatprep.subr.mxu0 0.0
    %954 = vmatpush2.msra.mxu0 0.0
    %955 = vmatprep.subr.mxu0 0.0
    %956 = vmatpush2.msra.mxu0 0.0
    %957 = vmatprep.subr.mxu0 0.0
    %958 = vmatpush2.msra.mxu0 0.0
    %959 = vmatprep.subr.mxu0 0.0
    %960 = vmatpush2.msra.mxu0 0.0
    %961 = vmatprep.subr.mxu0 0.0
    %962 = vmatpush2.msra.mxu0 0.0
    %963 = vmatprep.subr.mxu0 0.0
    %964 = vmatpush2.msra.mxu0 0.0
    %965 = vmatprep.subr.mxu0 0.0
    %966 = vmatpush2.msra.mxu0 0.0
    %967 = vmatprep.subr.mxu0 0.0
    %968 = vmatpush2.msra.mxu0 0.0
    %969 = vmatprep.mubr.f32.mxu0 0.0
    %970 = vmatmul.mubr.f32.gmra.mxu0 %v900
    %v971 = vpop.f32.mrf.mxu0
    %v972 = vadd.f32 %v891, %v971
    %v973 = vpop.f32.mrf.mxu0
    %974 = vmatprep.mubr.f32.mxu0 0.0
    %975 = vmatmul.mubr.f32.gmra.mxu0 %v903
    %v976 = vpop.f32.mrf.mxu0
    %v977 = vadd.f32 %v896, %v976
    %v978 = vpop.f32.mrf.mxu0
    %979 = vdwg.mxu0
    %980 = vrot.lane.b32.xlu0 %v148, 112
    %v981 = vpop.permute.xlu0 %980
    %982 = vrot.lane.b32.xlu0 %v148, 80
    %v983 = vpop.permute.xlu0 %982
    %v984 = vsel %vm159, %v981, 0
    %v986 = vsel %vm159, %v983, 0
    %988 = vmatprep.subr.mxu0 0.0
    %989 = vmatpush1.xpose.msra.mxu0 0.0
    %990 = vmatprep.subr.mxu0 0.0
    %991 = vmatpush1.xpose.msra.mxu0 0.0
    %992 = vmatprep.subr.mxu0 0.0
    %993 = vmatpush1.xpose.msra.mxu0 0.0
    %994 = vmatprep.subr.mxu0 0.0
    %995 = vmatpush1.xpose.msra.mxu0 0.0
    %996 = vmatprep.subr.mxu0 0.0
    %997 = vmatpush1.xpose.msra.mxu0 0.0
    %998 = vmatprep.subr.mxu0 0.0
    %999 = vmatpush1.xpose.msra.mxu0 0.0
    %1000 = vmatprep.subr.mxu0 0.0
    %1001 = vmatpush1.xpose.msra.mxu0 0.0
    %1002 = vmatprep.subr.mxu0 0.0
    %1003 = vmatpush1.xpose.msra.mxu0 0.0
    %1004 = vmatprep.subr.mxu0 0.0
    %1005 = vmatpush1.xpose.msra.mxu0 0.0
    %1006 = vmatprep.subr.mxu0 0.0
    %1007 = vmatpush1.xpose.msra.mxu0 0.0
    %1008 = vmatprep.subr.mxu0 0.0
    %1009 = vmatpush1.xpose.msra.mxu0 0.0
    %1010 = vmatprep.subr.mxu0 0.0
    %1011 = vmatpush1.xpose.msra.mxu0 0.0
    %1012 = vmatprep.subr.mxu0 0.0
    %1013 = vmatpush1.xpose.msra.mxu0 0.0
    %1014 = vmatprep.subr.mxu0 0.0
    %1015 = vmatpush1.xpose.msra.mxu0 0.0
    %1016 = vmatprep.subr.mxu0 0.0
    %1017 = vmatpush1.xpose.msra.mxu0 0.0
    %1018 = vmatprep.subr.mxu0 0.0
    %1019 = vmatpush1.xpose.msra.mxu0 %v986
    %1020 = vmatprep.subr.mxu0 0.0
    %1021 = vmatpush2.xpose.msra.mxu0 0.0
    %1022 = vmatprep.subr.mxu0 0.0
    %1023 = vmatpush2.xpose.msra.mxu0 0.0
    %1024 = vmatprep.subr.mxu0 0.0
    %1025 = vmatpush2.xpose.msra.mxu0 0.0
    %1026 = vmatprep.subr.mxu0 0.0
    %1027 = vmatpush2.xpose.msra.mxu0 0.0
    %1028 = vmatprep.subr.mxu0 0.0
    %1029 = vmatpush2.xpose.msra.mxu0 0.0
    %1030 = vmatprep.subr.mxu0 0.0
    %1031 = vmatpush2.xpose.msra.mxu0 0.0
    %1032 = vmatprep.subr.mxu0 0.0
    %1033 = vmatpush2.xpose.msra.mxu0 0.0
    %1034 = vmatprep.subr.mxu0 0.0
    %1035 = vmatpush2.xpose.msra.mxu0 0.0
    %1036 = vmatprep.subr.mxu0 0.0
    %1037 = vmatpush2.xpose.msra.mxu0 0.0
    %1038 = vmatprep.subr.mxu0 0.0
    %1039 = vmatpush2.xpose.msra.mxu0 0.0
    %1040 = vmatprep.subr.mxu0 0.0
    %1041 = vmatpush2.xpose.msra.mxu0 0.0
    %1042 = vmatprep.subr.mxu0 0.0
    %1043 = vmatpush2.xpose.msra.mxu0 0.0
    %1044 = vmatprep.subr.mxu0 0.0
    %1045 = vmatpush2.xpose.msra.mxu0 0.0
    %1046 = vmatprep.subr.mxu0 0.0
    %1047 = vmatpush2.xpose.msra.mxu0 0.0
    %1048 = vmatprep.subr.mxu0 0.0
    %1049 = vmatpush2.xpose.msra.mxu0 0.0
    %1050 = vmatprep.subr.mxu0 0.0
    %1051 = vmatpush2.xpose.msra.mxu0 0.0
    %1052 = vmatprep.mubr.f32.mxu0 0.0
    %1053 = vmatmul.mubr.f32.gmra.mxu0 %v984
    %v1054 = vpop.f32.mrf.mxu0
    %v1055 = vadd.f32 0.0, %v1054
    %v1056 = vpop.f32.mrf.mxu0
    %1057 = vdwg.mxu0
    %1058 = vrot.lane.b32.xlu0 %v153, 112
    %v1059 = vpop.permute.xlu0 %1058
    %1060 = vrot.lane.b32.xlu0 %v153, 80
    %v1061 = vpop.permute.xlu0 %1060
    %v1062 = vsel %vm159, %v1059, 0
    %v1064 = vsel %vm159, %v1061, 0
    %1066 = vmatprep.subr.mxu0 0.0
    %1067 = vmatpush1.xpose.msra.mxu0 0.0
    %1068 = vmatprep.subr.mxu0 0.0
    %1069 = vmatpush1.xpose.msra.mxu0 0.0
    %1070 = vmatprep.subr.mxu0 0.0
    %1071 = vmatpush1.xpose.msra.mxu0 0.0
    %1072 = vmatprep.subr.mxu0 0.0
    %1073 = vmatpush1.xpose.msra.mxu0 0.0
    %1074 = vmatprep.subr.mxu0 0.0
    %1075 = vmatpush1.xpose.msra.mxu0 0.0
    %1076 = vmatprep.subr.mxu0 0.0
    %1077 = vmatpush1.xpose.msra.mxu0 0.0
    %1078 = vmatprep.subr.mxu0 0.0
    %1079 = vmatpush1.xpose.msra.mxu0 0.0
    %1080 = vmatprep.subr.mxu0 0.0
    %1081 = vmatpush1.xpose.msra.mxu0 0.0
    %1082 = vmatprep.subr.mxu0 0.0
    %1083 = vmatpush1.xpose.msra.mxu0 0.0
    %1084 = vmatprep.subr.mxu0 0.0
    %1085 = vmatpush1.xpose.msra.mxu0 0.0
    %1086 = vmatprep.subr.mxu0 0.0
    %1087 = vmatpush1.xpose.msra.mxu0 0.0
    %1088 = vmatprep.subr.mxu0 0.0
    %1089 = vmatpush1.xpose.msra.mxu0 0.0
    %1090 = vmatprep.subr.mxu0 0.0
    %1091 = vmatpush1.xpose.msra.mxu0 0.0
    %1092 = vmatprep.subr.mxu0 0.0
    %1093 = vmatpush1.xpose.msra.mxu0 0.0
    %1094 = vmatprep.subr.mxu0 0.0
    %1095 = vmatpush1.xpose.msra.mxu0 0.0
    %1096 = vmatprep.subr.mxu0 0.0
    %1097 = vmatpush1.xpose.msra.mxu0 %v1064
    %1098 = vmatprep.subr.mxu0 0.0
    %1099 = vmatpush2.xpose.msra.mxu0 0.0
    %1100 = vmatprep.subr.mxu0 0.0
    %1101 = vmatpush2.xpose.msra.mxu0 0.0
    %1102 = vmatprep.subr.mxu0 0.0
    %1103 = vmatpush2.xpose.msra.mxu0 0.0
    %1104 = vmatprep.subr.mxu0 0.0
    %1105 = vmatpush2.xpose.msra.mxu0 0.0
    %1106 = vmatprep.subr.mxu0 0.0
    %1107 = vmatpush2.xpose.msra.mxu0 0.0
    %1108 = vmatprep.subr.mxu0 0.0
    %1109 = vmatpush2.xpose.msra.mxu0 0.0
    %1110 = vmatprep.subr.mxu0 0.0
    %1111 = vmatpush2.xpose.msra.mxu0 0.0
    %1112 = vmatprep.subr.mxu0 0.0
    %1113 = vmatpush2.xpose.msra.mxu0 0.0
    %1114 = vmatprep.subr.mxu0 0.0
    %1115 = vmatpush2.xpose.msra.mxu0 0.0
    %1116 = vmatprep.subr.mxu0 0.0
    %1117 = vmatpush2.xpose.msra.mxu0 0.0
    %1118 = vmatprep.subr.mxu0 0.0
    %1119 = vmatpush2.xpose.msra.mxu0 0.0
    %1120 = vmatprep.subr.mxu0 0.0
    %1121 = vmatpush2.xpose.msra.mxu0 0.0
    %1122 = vmatprep.subr.mxu0 0.0
    %1123 = vmatpush2.xpose.msra.mxu0 0.0
    %1124 = vmatprep.subr.mxu0 0.0
    %1125 = vmatpush2.xpose.msra.mxu0 0.0
    %1126 = vmatprep.subr.mxu0 0.0
    %1127 = vmatpush2.xpose.msra.mxu0 0.0
    %1128 = vmatprep.subr.mxu0 0.0
    %1129 = vmatpush2.xpose.msra.mxu0 0.0
    %1130 = vmatprep.mubr.f32.mxu0 0.0
    %1131 = vmatmul.mubr.f32.gmra.mxu0 %v1062
    %v1132 = vpop.f32.mrf.mxu0
    %v1133 = vadd.f32 0.0, %v1132
    %v1134 = vpop.f32.mrf.mxu0
    %1135 = vdwg.mxu0
    %v1136 = vsel %vm159, %v1055, -inf
    %1137 = vmax.xlane.f32.xlu0 %v1136
    %v1138 = vpop.xlane.xlu0 %1137
    %v1139 = vsel %vm159, %v1133, -inf
    %1140 = vmax.xlane.f32.xlu0 %v1139
    %v1141 = vpop.xlane.xlu0 %1140
    %v1142 = vsub.f32 %v1055, %v1138
    %v1143 = vsub.f32 %v1133, %v1141
    %v1144 = vmul.f32 %v1142, 1.442695
    %v1145 = vpow.pop %v1144
    %v1146 = vmul.f32 %v1143, 1.442695
    %v1147 = vpow.pop %v1146
    %v1148 = vsel %vm159, %v1145, 0.0
    %1149 = vadd.xlane.f32.xlu0 %v1148
    %v1150 = vpop.xlane.xlu0 %1149
    %v1151 = vsel %vm159, %v1147, 0.0
    %1152 = vadd.xlane.f32.xlu0 %v1151
    %v1153 = vpop.xlane.xlu0 %1152
    %v1154 = vrcp.pop %v1150
    %v1155 = vrcp.pop %v1153
    %v1156 = vmul.f32 %v1145, %v1154
    %v1157 = vmul.f32 %v1147, %v1155
    %1158 = vrot.lane.b32.xlu0 %v148, 48
    %v1159 = vpop.permute.xlu0 %1158
    %v1162 = vsel %vm159, %v1156, 0
    %1164 = vmatprep.subr.mxu0 0.0
    %1165 = vmatpush1.msra.mxu0 0.0
    %1166 = vmatprep.subr.mxu0 0.0
    %1167 = vmatpush1.msra.mxu0 0.0
    %1168 = vmatprep.subr.mxu0 0.0
    %1169 = vmatpush1.msra.mxu0 0.0
    %1170 = vmatprep.subr.mxu0 0.0
    %1171 = vmatpush1.msra.mxu0 0.0
    %1172 = vmatprep.subr.mxu0 0.0
    %1173 = vmatpush1.msra.mxu0 0.0
    %1174 = vmatprep.subr.mxu0 0.0
    %1175 = vmatpush1.msra.mxu0 0.0
    %1176 = vmatprep.subr.mxu0 0.0
    %1177 = vmatpush1.msra.mxu0 0.0
    %1178 = vmatprep.subr.mxu0 0.0
    %1179 = vmatpush1.msra.mxu0 0.0
    %1180 = vmatprep.subr.mxu0 0.0
    %1181 = vmatpush1.msra.mxu0 0.0
    %1182 = vmatprep.subr.mxu0 0.0
    %1183 = vmatpush1.msra.mxu0 0.0
    %1184 = vmatprep.subr.mxu0 0.0
    %1185 = vmatpush1.msra.mxu0 0.0
    %1186 = vmatprep.subr.mxu0 0.0
    %1187 = vmatpush1.msra.mxu0 0.0
    %1188 = vmatprep.subr.mxu0 0.0
    %1189 = vmatpush1.msra.mxu0 0.0
    %1190 = vmatprep.subr.mxu0 0.0
    %1191 = vmatpush1.msra.mxu0 0.0
    %1192 = vmatprep.subr.mxu0 0.0
    %1193 = vmatpush1.msra.mxu0 0.0
    %1194 = vmatprep.subr.mxu0 0.0
    %1195 = vmatpush1.msra.mxu0 %v1159
    %1196 = vmatprep.subr.mxu0 0.0
    %1197 = vmatpush2.msra.mxu0 0.0
    %1198 = vmatprep.subr.mxu0 0.0
    %1199 = vmatpush2.msra.mxu0 0.0
    %1200 = vmatprep.subr.mxu0 0.0
    %1201 = vmatpush2.msra.mxu0 0.0
    %1202 = vmatprep.subr.mxu0 0.0
    %1203 = vmatpush2.msra.mxu0 0.0
    %1204 = vmatprep.subr.mxu0 0.0
    %1205 = vmatpush2.msra.mxu0 0.0
    %1206 = vmatprep.subr.mxu0 0.0
    %1207 = vmatpush2.msra.mxu0 0.0
    %1208 = vmatprep.subr.mxu0 0.0
    %1209 = vmatpush2.msra.mxu0 0.0
    %1210 = vmatprep.subr.mxu0 0.0
    %1211 = vmatpush2.msra.mxu0 0.0
    %1212 = vmatprep.subr.mxu0 0.0
    %1213 = vmatpush2.msra.mxu0 0.0
    %1214 = vmatprep.subr.mxu0 0.0
    %1215 = vmatpush2.msra.mxu0 0.0
    %1216 = vmatprep.subr.mxu0 0.0
    %1217 = vmatpush2.msra.mxu0 0.0
    %1218 = vmatprep.subr.mxu0 0.0
    %1219 = vmatpush2.msra.mxu0 0.0
    %1220 = vmatprep.subr.mxu0 0.0
    %1221 = vmatpush2.msra.mxu0 0.0
    %1222 = vmatprep.subr.mxu0 0.0
    %1223 = vmatpush2.msra.mxu0 0.0
    %1224 = vmatprep.subr.mxu0 0.0
    %1225 = vmatpush2.msra.mxu0 0.0
    %1226 = vmatprep.subr.mxu0 0.0
    %1227 = vmatpush2.msra.mxu0 0.0
    %1228 = vmatprep.mubr.f32.mxu0 0.0
    %1229 = vmatmul.mubr.f32.gmra.mxu0 %v1162
    %v1230 = vpop.f32.mrf.mxu0
    %v1231 = vadd.f32 0.0, %v1230
    %v1232 = vpop.f32.mrf.mxu0
    %1233 = vdwg.mxu0
    %1234 = vrot.lane.b32.xlu0 %v153, 48
    %v1235 = vpop.permute.xlu0 %1234
    %v1238 = vsel %vm159, %v1157, 0
    %1240 = vmatprep.subr.mxu0 0.0
    %1241 = vmatpush1.msra.mxu0 0.0
    %1242 = vmatprep.subr.mxu0 0.0
    %1243 = vmatpush1.msra.mxu0 0.0
    %1244 = vmatprep.subr.mxu0 0.0
    %1245 = vmatpush1.msra.mxu0 0.0
    %1246 = vmatprep.subr.mxu0 0.0
    %1247 = vmatpush1.msra.mxu0 0.0
    %1248 = vmatprep.subr.mxu0 0.0
    %1249 = vmatpush1.msra.mxu0 0.0
    %1250 = vmatprep.subr.mxu0 0.0
    %1251 = vmatpush1.msra.mxu0 0.0
    %1252 = vmatprep.subr.mxu0 0.0
    %1253 = vmatpush1.msra.mxu0 0.0
    %1254 = vmatprep.subr.mxu0 0.0
    %1255 = vmatpush1.msra.mxu0 0.0
    %1256 = vmatprep.subr.mxu0 0.0
    %1257 = vmatpush1.msra.mxu0 0.0
    %1258 = vmatprep.subr.mxu0 0.0
    %1259 = vmatpush1.msra.mxu0 0.0
    %1260 = vmatprep.subr.mxu0 0.0
    %1261 = vmatpush1.msra.mxu0 0.0
    %1262 = vmatprep.subr.mxu0 0.0
    %1263 = vmatpush1.msra.mxu0 0.0
    %1264 = vmatprep.subr.mxu0 0.0
    %1265 = vmatpush1.msra.mxu0 0.0
    %1266 = vmatprep.subr.mxu0 0.0
    %1267 = vmatpush1.msra.mxu0 0.0
    %1268 = vmatprep.subr.mxu0 0.0
    %1269 = vmatpush1.msra.mxu0 0.0
    %1270 = vmatprep.subr.mxu0 0.0
    %1271 = vmatpush1.msra.mxu0 %v1235
    %1272 = vmatprep.subr.mxu0 0.0
    %1273 = vmatpush2.msra.mxu0 0.0
    %1274 = vmatprep.subr.mxu0 0.0
    %1275 = vmatpush2.msra.mxu0 0.0
    %1276 = vmatprep.subr.mxu0 0.0
    %1277 = vmatpush2.msra.mxu0 0.0
    %1278 = vmatprep.subr.mxu0 0.0
    %1279 = vmatpush2.msra.mxu0 0.0
    %1280 = vmatprep.subr.mxu0 0.0
    %1281 = vmatpush2.msra.mxu0 0.0
    %1282 = vmatprep.subr.mxu0 0.0
    %1283 = vmatpush2.msra.mxu0 0.0
    %1284 = vmatprep.subr.mxu0 0.0
    %1285 = vmatpush2.msra.mxu0 0.0
    %1286 = vmatprep.subr.mxu0 0.0
    %1287 = vmatpush2.msra.mxu0 0.0
    %1288 = vmatprep.subr.mxu0 0.0
    %1289 = vmatpush2.msra.mxu0 0.0
    %1290 = vmatprep.subr.mxu0 0.0
    %1291 = vmatpush2.msra.mxu0 0.0
    %1292 = vmatprep.subr.mxu0 0.0
    %1293 = vmatpush2.msra.mxu0 0.0
    %1294 = vmatprep.subr.mxu0 0.0
    %1295 = vmatpush2.msra.mxu0 0.0
    %1296 = vmatprep.subr.mxu0 0.0
    %1297 = vmatpush2.msra.mxu0 0.0
    %1298 = vmatprep.subr.mxu0 0.0
    %1299 = vmatpush2.msra.mxu0 0.0
    %1300 = vmatprep.subr.mxu0 0.0
    %1301 = vmatpush2.msra.mxu0 0.0
    %1302 = vmatprep.subr.mxu0 0.0
    %1303 = vmatpush2.msra.mxu0 0.0
    %1304 = vmatprep.mubr.f32.mxu0 0.0
    %1305 = vmatmul.mubr.f32.gmra.mxu0 %v1238
    %v1306 = vpop.f32.mrf.mxu0
    %v1307 = vadd.f32 0.0, %v1306
    %v1308 = vpop.f32.mrf.mxu0
    %1309 = vdwg.mxu0
    %s1310 = scalar_lea.vmem %s3, 16
    %v1311 = vld [vmem:[%s1310] sm:$0xff]
    %v1313 = vsel %vm159, %v1231, 0
    %v1316 = vsel %vm159, %v1307, 0
    %1318 = vmatprep.subr.mxu0 0.0
    %1319 = vmatpush1.msra.mxu0 0.0
    %1320 = vmatprep.subr.mxu0 0.0
    %1321 = vmatpush1.msra.mxu0 0.0
    %1322 = vmatprep.subr.mxu0 0.0
    %1323 = vmatpush1.msra.mxu0 0.0
    %1324 = vmatprep.subr.mxu0 0.0
    %1325 = vmatpush1.msra.mxu0 0.0
    %1326 = vmatprep.subr.mxu0 0.0
    %1327 = vmatpush1.msra.mxu0 0.0
    %1328 = vmatprep.subr.mxu0 0.0
    %1329 = vmatpush1.msra.mxu0 0.0
    %1330 = vmatprep.subr.mxu0 0.0
    %1331 = vmatpush1.msra.mxu0 0.0
    %1332 = vmatprep.subr.mxu0 0.0
    %1333 = vmatpush1.msra.mxu0 0.0
    %1334 = vmatprep.subr.mxu0 0.0
    %1335 = vmatpush1.msra.mxu0 0.0
    %1336 = vmatprep.subr.mxu0 0.0
    %1337 = vmatpush1.msra.mxu0 0.0
    %1338 = vmatprep.subr.mxu0 0.0
    %1339 = vmatpush1.msra.mxu0 0.0
    %1340 = vmatprep.subr.mxu0 0.0
    %1341 = vmatpush1.msra.mxu0 0.0
    %1342 = vmatprep.subr.mxu0 0.0
    %1343 = vmatpush1.msra.mxu0 0.0
    %1344 = vmatprep.subr.mxu0 0.0
    %1345 = vmatpush1.msra.mxu0 0.0
    %1346 = vmatprep.subr.mxu0 0.0
    %1347 = vmatpush1.msra.mxu0 0.0
    %1348 = vmatprep.subr.mxu0 0.0
    %1349 = vmatpush1.msra.mxu0 %v1311
    %1350 = vmatprep.subr.mxu0 0.0
    %1351 = vmatpush2.msra.mxu0 0.0
    %1352 = vmatprep.subr.mxu0 0.0
    %1353 = vmatpush2.msra.mxu0 0.0
    %1354 = vmatprep.subr.mxu0 0.0
    %1355 = vmatpush2.msra.mxu0 0.0
    %1356 = vmatprep.subr.mxu0 0.0
    %1357 = vmatpush2.msra.mxu0 0.0
    %1358 = vmatprep.subr.mxu0 0.0
    %1359 = vmatpush2.msra.mxu0 0.0
    %1360 = vmatprep.subr.mxu0 0.0
    %1361 = vmatpush2.msra.mxu0 0.0
    %1362 = vmatprep.subr.mxu0 0.0
    %1363 = vmatpush2.msra.mxu0 0.0
    %1364 = vmatprep.subr.mxu0 0.0
    %1365 = vmatpush2.msra.mxu0 0.0
    %1366 = vmatprep.subr.mxu0 0.0
    %1367 = vmatpush2.msra.mxu0 0.0
    %1368 = vmatprep.subr.mxu0 0.0
    %1369 = vmatpush2.msra.mxu0 0.0
    %1370 = vmatprep.subr.mxu0 0.0
    %1371 = vmatpush2.msra.mxu0 0.0
    %1372 = vmatprep.subr.mxu0 0.0
    %1373 = vmatpush2.msra.mxu0 0.0
    %1374 = vmatprep.subr.mxu0 0.0
    %1375 = vmatpush2.msra.mxu0 0.0
    %1376 = vmatprep.subr.mxu0 0.0
    %1377 = vmatpush2.msra.mxu0 0.0
    %1378 = vmatprep.subr.mxu0 0.0
    %1379 = vmatpush2.msra.mxu0 0.0
    %1380 = vmatprep.subr.mxu0 0.0
    %1381 = vmatpush2.msra.mxu0 0.0
    %1382 = vmatprep.mubr.f32.mxu0 0.0
    %1383 = vmatmul.mubr.f32.gmra.mxu0 %v1313
    %v1384 = vpop.f32.mrf.mxu0
    %v1385 = vadd.f32 0.0, %v1384
    %v1386 = vpop.f32.mrf.mxu0
    %1387 = vmatprep.mubr.f32.mxu0 0.0
    %1388 = vmatmul.mubr.f32.gmra.mxu0 %v1316
    %v1389 = vpop.f32.mrf.mxu0
    %v1390 = vadd.f32 0.0, %v1389
    %v1391 = vpop.f32.mrf.mxu0
    %1392 = vdwg.mxu0
    %v1393 = vadd.f32 %v972, %v1385
    %v1394 = vadd.f32 %v977, %v1390
    %1395 = vrot.lane.b32.xlu0 %v148, 104
    %v1396 = vpop.permute.xlu0 %1395
    %1397 = vrot.lane.b32.xlu0 %v148, 72
    %v1398 = vpop.permute.xlu0 %1397
    %v1399 = vsel %vm159, %v1396, 0
    %v1401 = vsel %vm159, %v1398, 0
    %1403 = vmatprep.subr.mxu0 0.0
    %1404 = vmatpush1.xpose.msra.mxu0 0.0
    %1405 = vmatprep.subr.mxu0 0.0
    %1406 = vmatpush1.xpose.msra.mxu0 0.0
    %1407 = vmatprep.subr.mxu0 0.0
    %1408 = vmatpush1.xpose.msra.mxu0 0.0
    %1409 = vmatprep.subr.mxu0 0.0
    %1410 = vmatpush1.xpose.msra.mxu0 0.0
    %1411 = vmatprep.subr.mxu0 0.0
    %1412 = vmatpush1.xpose.msra.mxu0 0.0
    %1413 = vmatprep.subr.mxu0 0.0
    %1414 = vmatpush1.xpose.msra.mxu0 0.0
    %1415 = vmatprep.subr.mxu0 0.0
    %1416 = vmatpush1.xpose.msra.mxu0 0.0
    %1417 = vmatprep.subr.mxu0 0.0
    %1418 = vmatpush1.xpose.msra.mxu0 0.0
    %1419 = vmatprep.subr.mxu0 0.0
    %1420 = vmatpush1.xpose.msra.mxu0 0.0
    %1421 = vmatprep.subr.mxu0 0.0
    %1422 = vmatpush1.xpose.msra.mxu0 0.0
    %1423 = vmatprep.subr.mxu0 0.0
    %1424 = vmatpush1.xpose.msra.mxu0 0.0
    %1425 = vmatprep.subr.mxu0 0.0
    %1426 = vmatpush1.xpose.msra.mxu0 0.0
    %1427 = vmatprep.subr.mxu0 0.0
    %1428 = vmatpush1.xpose.msra.mxu0 0.0
    %1429 = vmatprep.subr.mxu0 0.0
    %1430 = vmatpush1.xpose.msra.mxu0 0.0
    %1431 = vmatprep.subr.mxu0 0.0
    %1432 = vmatpush1.xpose.msra.mxu0 0.0
    %1433 = vmatprep.subr.mxu0 0.0
    %1434 = vmatpush1.xpose.msra.mxu0 %v1401
    %1435 = vmatprep.subr.mxu0 0.0
    %1436 = vmatpush2.xpose.msra.mxu0 0.0
    %1437 = vmatprep.subr.mxu0 0.0
    %1438 = vmatpush2.xpose.msra.mxu0 0.0
    %1439 = vmatprep.subr.mxu0 0.0
    %1440 = vmatpush2.xpose.msra.mxu0 0.0
    %1441 = vmatprep.subr.mxu0 0.0
    %1442 = vmatpush2.xpose.msra.mxu0 0.0
    %1443 = vmatprep.subr.mxu0 0.0
    %1444 = vmatpush2.xpose.msra.mxu0 0.0
    %1445 = vmatprep.subr.mxu0 0.0
    %1446 = vmatpush2.xpose.msra.mxu0 0.0
    %1447 = vmatprep.subr.mxu0 0.0
    %1448 = vmatpush2.xpose.msra.mxu0 0.0
    %1449 = vmatprep.subr.mxu0 0.0
    %1450 = vmatpush2.xpose.msra.mxu0 0.0
    %1451 = vmatprep.subr.mxu0 0.0
    %1452 = vmatpush2.xpose.msra.mxu0 0.0
    %1453 = vmatprep.subr.mxu0 0.0
    %1454 = vmatpush2.xpose.msra.mxu0 0.0
    %1455 = vmatprep.subr.mxu0 0.0
    %1456 = vmatpush2.xpose.msra.mxu0 0.0
    %1457 = vmatprep.subr.mxu0 0.0
    %1458 = vmatpush2.xpose.msra.mxu0 0.0
    %1459 = vmatprep.subr.mxu0 0.0
    %1460 = vmatpush2.xpose.msra.mxu0 0.0
    %1461 = vmatprep.subr.mxu0 0.0
    %1462 = vmatpush2.xpose.msra.mxu0 0.0
    %1463 = vmatprep.subr.mxu0 0.0
    %1464 = vmatpush2.xpose.msra.mxu0 0.0
    %1465 = vmatprep.subr.mxu0 0.0
    %1466 = vmatpush2.xpose.msra.mxu0 0.0
    %1467 = vmatprep.mubr.f32.mxu0 0.0
    %1468 = vmatmul.mubr.f32.gmra.mxu0 %v1399
    %v1469 = vpop.f32.mrf.mxu0
    %v1470 = vadd.f32 0.0, %v1469
    %v1471 = vpop.f32.mrf.mxu0
    %1472 = vdwg.mxu0
    %1473 = vrot.lane.b32.xlu0 %v153, 104
    %v1474 = vpop.permute.xlu0 %1473
    %1475 = vrot.lane.b32.xlu0 %v153, 72
    %v1476 = vpop.permute.xlu0 %1475
    %v1477 = vsel %vm159, %v1474, 0
    %v1479 = vsel %vm159, %v1476, 0
    %1481 = vmatprep.subr.mxu0 0.0
    %1482 = vmatpush1.xpose.msra.mxu0 0.0
    %1483 = vmatprep.subr.mxu0 0.0
    %1484 = vmatpush1.xpose.msra.mxu0 0.0
    %1485 = vmatprep.subr.mxu0 0.0
    %1486 = vmatpush1.xpose.msra.mxu0 0.0
    %1487 = vmatprep.subr.mxu0 0.0
    %1488 = vmatpush1.xpose.msra.mxu0 0.0
    %1489 = vmatprep.subr.mxu0 0.0
    %1490 = vmatpush1.xpose.msra.mxu0 0.0
    %1491 = vmatprep.subr.mxu0 0.0
    %1492 = vmatpush1.xpose.msra.mxu0 0.0
    %1493 = vmatprep.subr.mxu0 0.0
    %1494 = vmatpush1.xpose.msra.mxu0 0.0
    %1495 = vmatprep.subr.mxu0 0.0
    %1496 = vmatpush1.xpose.msra.mxu0 0.0
    %1497 = vmatprep.subr.mxu0 0.0
    %1498 = vmatpush1.xpose.msra.mxu0 0.0
    %1499 = vmatprep.subr.mxu0 0.0
    %1500 = vmatpush1.xpose.msra.mxu0 0.0
    %1501 = vmatprep.subr.mxu0 0.0
    %1502 = vmatpush1.xpose.msra.mxu0 0.0
    %1503 = vmatprep.subr.mxu0 0.0
    %1504 = vmatpush1.xpose.msra.mxu0 0.0
    %1505 = vmatprep.subr.mxu0 0.0
    %1506 = vmatpush1.xpose.msra.mxu0 0.0
    %1507 = vmatprep.subr.mxu0 0.0
    %1508 = vmatpush1.xpose.msra.mxu0 0.0
    %1509 = vmatprep.subr.mxu0 0.0
    %1510 = vmatpush1.xpose.msra.mxu0 0.0
    %1511 = vmatprep.subr.mxu0 0.0
    %1512 = vmatpush1.xpose.msra.mxu0 %v1479
    %1513 = vmatprep.subr.mxu0 0.0
    %1514 = vmatpush2.xpose.msra.mxu0 0.0
    %1515 = vmatprep.subr.mxu0 0.0
    %1516 = vmatpush2.xpose.msra.mxu0 0.0
    %1517 = vmatprep.subr.mxu0 0.0
    %1518 = vmatpush2.xpose.msra.mxu0 0.0
    %1519 = vmatprep.subr.mxu0 0.0
    %1520 = vmatpush2.xpose.msra.mxu0 0.0
    %1521 = vmatprep.subr.mxu0 0.0
    %1522 = vmatpush2.xpose.msra.mxu0 0.0
    %1523 = vmatprep.subr.mxu0 0.0
    %1524 = vmatpush2.xpose.msra.mxu0 0.0
    %1525 = vmatprep.subr.mxu0 0.0
    %1526 = vmatpush2.xpose.msra.mxu0 0.0
    %1527 = vmatprep.subr.mxu0 0.0
    %1528 = vmatpush2.xpose.msra.mxu0 0.0
    %1529 = vmatprep.subr.mxu0 0.0
    %1530 = vmatpush2.xpose.msra.mxu0 0.0
    %1531 = vmatprep.subr.mxu0 0.0
    %1532 = vmatpush2.xpose.msra.mxu0 0.0
    %1533 = vmatprep.subr.mxu0 0.0
    %1534 = vmatpush2.xpose.msra.mxu0 0.0
    %1535 = vmatprep.subr.mxu0 0.0
    %1536 = vmatpush2.xpose.msra.mxu0 0.0
    %1537 = vmatprep.subr.mxu0 0.0
    %1538 = vmatpush2.xpose.msra.mxu0 0.0
    %1539 = vmatprep.subr.mxu0 0.0
    %1540 = vmatpush2.xpose.msra.mxu0 0.0
    %1541 = vmatprep.subr.mxu0 0.0
    %1542 = vmatpush2.xpose.msra.mxu0 0.0
    %1543 = vmatprep.subr.mxu0 0.0
    %1544 = vmatpush2.xpose.msra.mxu0 0.0
    %1545 = vmatprep.mubr.f32.mxu0 0.0
    %1546 = vmatmul.mubr.f32.gmra.mxu0 %v1477
    %v1547 = vpop.f32.mrf.mxu0
    %v1548 = vadd.f32 0.0, %v1547
    %v1549 = vpop.f32.mrf.mxu0
    %1550 = vdwg.mxu0
    %v1551 = vsel %vm159, %v1470, -inf
    %1552 = vmax.xlane.f32.xlu0 %v1551
    %v1553 = vpop.xlane.xlu0 %1552
    %v1554 = vsel %vm159, %v1548, -inf
    %1555 = vmax.xlane.f32.xlu0 %v1554
    %v1556 = vpop.xlane.xlu0 %1555
    %v1557 = vsub.f32 %v1470, %v1553
    %v1558 = vsub.f32 %v1548, %v1556
    %v1559 = vmul.f32 %v1557, 1.442695
    %v1560 = vpow.pop %v1559
    %v1561 = vmul.f32 %v1558, 1.442695
    %v1562 = vpow.pop %v1561
    %v1563 = vsel %vm159, %v1560, 0.0
    %1564 = vadd.xlane.f32.xlu0 %v1563
    %v1565 = vpop.xlane.xlu0 %1564
    %v1566 = vsel %vm159, %v1562, 0.0
    %1567 = vadd.xlane.f32.xlu0 %v1566
    %v1568 = vpop.xlane.xlu0 %1567
    %v1569 = vrcp.pop %v1565
    %v1570 = vrcp.pop %v1568
    %v1571 = vmul.f32 %v1560, %v1569
    %v1572 = vmul.f32 %v1562, %v1570
    %1573 = vrot.lane.b32.xlu0 %v148, 40
    %v1574 = vpop.permute.xlu0 %1573
    %v1577 = vsel %vm159, %v1571, 0
    %1579 = vmatprep.subr.mxu0 0.0
    %1580 = vmatpush1.msra.mxu0 0.0
    %1581 = vmatprep.subr.mxu0 0.0
    %1582 = vmatpush1.msra.mxu0 0.0
    %1583 = vmatprep.subr.mxu0 0.0
    %1584 = vmatpush1.msra.mxu0 0.0
    %1585 = vmatprep.subr.mxu0 0.0
    %1586 = vmatpush1.msra.mxu0 0.0
    %1587 = vmatprep.subr.mxu0 0.0
    %1588 = vmatpush1.msra.mxu0 0.0
    %1589 = vmatprep.subr.mxu0 0.0
    %1590 = vmatpush1.msra.mxu0 0.0
    %1591 = vmatprep.subr.mxu0 0.0
    %1592 = vmatpush1.msra.mxu0 0.0
    %1593 = vmatprep.subr.mxu0 0.0
    %1594 = vmatpush1.msra.mxu0 0.0
    %1595 = vmatprep.subr.mxu0 0.0
    %1596 = vmatpush1.msra.mxu0 0.0
    %1597 = vmatprep.subr.mxu0 0.0
    %1598 = vmatpush1.msra.mxu0 0.0
    %1599 = vmatprep.subr.mxu0 0.0
    %1600 = vmatpush1.msra.mxu0 0.0
    %1601 = vmatprep.subr.mxu0 0.0
    %1602 = vmatpush1.msra.mxu0 0.0
    %1603 = vmatprep.subr.mxu0 0.0
    %1604 = vmatpush1.msra.mxu0 0.0
    %1605 = vmatprep.subr.mxu0 0.0
    %1606 = vmatpush1.msra.mxu0 0.0
    %1607 = vmatprep.subr.mxu0 0.0
    %1608 = vmatpush1.msra.mxu0 0.0
    %1609 = vmatprep.subr.mxu0 0.0
    %1610 = vmatpush1.msra.mxu0 %v1574
    %1611 = vmatprep.subr.mxu0 0.0
    %1612 = vmatpush2.msra.mxu0 0.0
    %1613 = vmatprep.subr.mxu0 0.0
    %1614 = vmatpush2.msra.mxu0 0.0
    %1615 = vmatprep.subr.mxu0 0.0
    %1616 = vmatpush2.msra.mxu0 0.0
    %1617 = vmatprep.subr.mxu0 0.0
    %1618 = vmatpush2.msra.mxu0 0.0
    %1619 = vmatprep.subr.mxu0 0.0
    %1620 = vmatpush2.msra.mxu0 0.0
    %1621 = vmatprep.subr.mxu0 0.0
    %1622 = vmatpush2.msra.mxu0 0.0
    %1623 = vmatprep.subr.mxu0 0.0
    %1624 = vmatpush2.msra.mxu0 0.0
    %1625 = vmatprep.subr.mxu0 0.0
    %1626 = vmatpush2.msra.mxu0 0.0
    %1627 = vmatprep.subr.mxu0 0.0
    %1628 = vmatpush2.msra.mxu0 0.0
    %1629 = vmatprep.subr.mxu0 0.0
    %1630 = vmatpush2.msra.mxu0 0.0
    %1631 = vmatprep.subr.mxu0 0.0
    %1632 = vmatpush2.msra.mxu0 0.0
    %1633 = vmatprep.subr.mxu0 0.0
    %1634 = vmatpush2.msra.mxu0 0.0
    %1635 = vmatprep.subr.mxu0 0.0
    %1636 = vmatpush2.msra.mxu0 0.0
    %1637 = vmatprep.subr.mxu0 0.0
    %1638 = vmatpush2.msra.mxu0 0.0
    %1639 = vmatprep.subr.mxu0 0.0
    %1640 = vmatpush2.msra.mxu0 0.0
    %1641 = vmatprep.subr.mxu0 0.0
    %1642 = vmatpush2.msra.mxu0 0.0
    %1643 = vmatprep.mubr.f32.mxu0 0.0
    %1644 = vmatmul.mubr.f32.gmra.mxu0 %v1577
    %v1645 = vpop.f32.mrf.mxu0
    %v1646 = vadd.f32 0.0, %v1645
    %v1647 = vpop.f32.mrf.mxu0
    %1648 = vdwg.mxu0
    %1649 = vrot.lane.b32.xlu0 %v153, 40
    %v1650 = vpop.permute.xlu0 %1649
    %v1653 = vsel %vm159, %v1572, 0
    %1655 = vmatprep.subr.mxu0 0.0
    %1656 = vmatpush1.msra.mxu0 0.0
    %1657 = vmatprep.subr.mxu0 0.0
    %1658 = vmatpush1.msra.mxu0 0.0
    %1659 = vmatprep.subr.mxu0 0.0
    %1660 = vmatpush1.msra.mxu0 0.0
    %1661 = vmatprep.subr.mxu0 0.0
    %1662 = vmatpush1.msra.mxu0 0.0
    %1663 = vmatprep.subr.mxu0 0.0
    %1664 = vmatpush1.msra.mxu0 0.0
    %1665 = vmatprep.subr.mxu0 0.0
    %1666 = vmatpush1.msra.mxu0 0.0
    %1667 = vmatprep.subr.mxu0 0.0
    %1668 = vmatpush1.msra.mxu0 0.0
    %1669 = vmatprep.subr.mxu0 0.0
    %1670 = vmatpush1.msra.mxu0 0.0
    %1671 = vmatprep.subr.mxu0 0.0
    %1672 = vmatpush1.msra.mxu0 0.0
    %1673 = vmatprep.subr.mxu0 0.0
    %1674 = vmatpush1.msra.mxu0 0.0
    %1675 = vmatprep.subr.mxu0 0.0
    %1676 = vmatpush1.msra.mxu0 0.0
    %1677 = vmatprep.subr.mxu0 0.0
    %1678 = vmatpush1.msra.mxu0 0.0
    %1679 = vmatprep.subr.mxu0 0.0
    %1680 = vmatpush1.msra.mxu0 0.0
    %1681 = vmatprep.subr.mxu0 0.0
    %1682 = vmatpush1.msra.mxu0 0.0
    %1683 = vmatprep.subr.mxu0 0.0
    %1684 = vmatpush1.msra.mxu0 0.0
    %1685 = vmatprep.subr.mxu0 0.0
    %1686 = vmatpush1.msra.mxu0 %v1650
    %1687 = vmatprep.subr.mxu0 0.0
    %1688 = vmatpush2.msra.mxu0 0.0
    %1689 = vmatprep.subr.mxu0 0.0
    %1690 = vmatpush2.msra.mxu0 0.0
    %1691 = vmatprep.subr.mxu0 0.0
    %1692 = vmatpush2.msra.mxu0 0.0
    %1693 = vmatprep.subr.mxu0 0.0
    %1694 = vmatpush2.msra.mxu0 0.0
    %1695 = vmatprep.subr.mxu0 0.0
    %1696 = vmatpush2.msra.mxu0 0.0
    %1697 = vmatprep.subr.mxu0 0.0
    %1698 = vmatpush2.msra.mxu0 0.0
    %1699 = vmatprep.subr.mxu0 0.0
    %1700 = vmatpush2.msra.mxu0 0.0
    %1701 = vmatprep.subr.mxu0 0.0
    %1702 = vmatpush2.msra.mxu0 0.0
    %1703 = vmatprep.subr.mxu0 0.0
    %1704 = vmatpush2.msra.mxu0 0.0
    %1705 = vmatprep.subr.mxu0 0.0
    %1706 = vmatpush2.msra.mxu0 0.0
    %1707 = vmatprep.subr.mxu0 0.0
    %1708 = vmatpush2.msra.mxu0 0.0
    %1709 = vmatprep.subr.mxu0 0.0
    %1710 = vmatpush2.msra.mxu0 0.0
    %1711 = vmatprep.subr.mxu0 0.0
    %1712 = vmatpush2.msra.mxu0 0.0
    %1713 = vmatprep.subr.mxu0 0.0
    %1714 = vmatpush2.msra.mxu0 0.0
    %1715 = vmatprep.subr.mxu0 0.0
    %1716 = vmatpush2.msra.mxu0 0.0
    %1717 = vmatprep.subr.mxu0 0.0
    %1718 = vmatpush2.msra.mxu0 0.0
    %1719 = vmatprep.mubr.f32.mxu0 0.0
    %1720 = vmatmul.mubr.f32.gmra.mxu0 %v1653
    %v1721 = vpop.f32.mrf.mxu0
    %v1722 = vadd.f32 0.0, %v1721
    %v1723 = vpop.f32.mrf.mxu0
    %1724 = vdwg.mxu0
    %s1725 = scalar_lea.vmem %s3, 24
    %v1726 = vld [vmem:[%s1725] sm:$0xff]
    %v1728 = vsel %vm159, %v1646, 0
    %v1731 = vsel %vm159, %v1722, 0
    %1733 = vmatprep.subr.mxu0 0.0
    %1734 = vmatpush1.msra.mxu0 0.0
    %1735 = vmatprep.subr.mxu0 0.0
    %1736 = vmatpush1.msra.mxu0 0.0
    %1737 = vmatprep.subr.mxu0 0.0
    %1738 = vmatpush1.msra.mxu0 0.0
    %1739 = vmatprep.subr.mxu0 0.0
    %1740 = vmatpush1.msra.mxu0 0.0
    %1741 = vmatprep.subr.mxu0 0.0
    %1742 = vmatpush1.msra.mxu0 0.0
    %1743 = vmatprep.subr.mxu0 0.0
    %1744 = vmatpush1.msra.mxu0 0.0
    %1745 = vmatprep.subr.mxu0 0.0
    %1746 = vmatpush1.msra.mxu0 0.0
    %1747 = vmatprep.subr.mxu0 0.0
    %1748 = vmatpush1.msra.mxu0 0.0
    %1749 = vmatprep.subr.mxu0 0.0
    %1750 = vmatpush1.msra.mxu0 0.0
    %1751 = vmatprep.subr.mxu0 0.0
    %1752 = vmatpush1.msra.mxu0 0.0
    %1753 = vmatprep.subr.mxu0 0.0
    %1754 = vmatpush1.msra.mxu0 0.0
    %1755 = vmatprep.subr.mxu0 0.0
    %1756 = vmatpush1.msra.mxu0 0.0
    %1757 = vmatprep.subr.mxu0 0.0
    %1758 = vmatpush1.msra.mxu0 0.0
    %1759 = vmatprep.subr.mxu0 0.0
    %1760 = vmatpush1.msra.mxu0 0.0
    %1761 = vmatprep.subr.mxu0 0.0
    %1762 = vmatpush1.msra.mxu0 0.0
    %1763 = vmatprep.subr.mxu0 0.0
    %1764 = vmatpush1.msra.mxu0 %v1726
    %1765 = vmatprep.subr.mxu0 0.0
    %1766 = vmatpush2.msra.mxu0 0.0
    %1767 = vmatprep.subr.mxu0 0.0
    %1768 = vmatpush2.msra.mxu0 0.0
    %1769 = vmatprep.subr.mxu0 0.0
    %1770 = vmatpush2.msra.mxu0 0.0
    %1771 = vmatprep.subr.mxu0 0.0
    %1772 = vmatpush2.msra.mxu0 0.0
    %1773 = vmatprep.subr.mxu0 0.0
    %1774 = vmatpush2.msra.mxu0 0.0
    %1775 = vmatprep.subr.mxu0 0.0
    %1776 = vmatpush2.msra.mxu0 0.0
    %1777 = vmatprep.subr.mxu0 0.0
    %1778 = vmatpush2.msra.mxu0 0.0
    %1779 = vmatprep.subr.mxu0 0.0
    %1780 = vmatpush2.msra.mxu0 0.0
    %1781 = vmatprep.subr.mxu0 0.0
    %1782 = vmatpush2.msra.mxu0 0.0
    %1783 = vmatprep.subr.mxu0 0.0
    %1784 = vmatpush2.msra.mxu0 0.0
    %1785 = vmatprep.subr.mxu0 0.0
    %1786 = vmatpush2.msra.mxu0 0.0
    %1787 = vmatprep.subr.mxu0 0.0
    %1788 = vmatpush2.msra.mxu0 0.0
    %1789 = vmatprep.subr.mxu0 0.0
    %1790 = vmatpush2.msra.mxu0 0.0
    %1791 = vmatprep.subr.mxu0 0.0
    %1792 = vmatpush2.msra.mxu0 0.0
    %1793 = vmatprep.subr.mxu0 0.0
    %1794 = vmatpush2.msra.mxu0 0.0
    %1795 = vmatprep.subr.mxu0 0.0
    %1796 = vmatpush2.msra.mxu0 0.0
    %1797 = vmatprep.mubr.f32.mxu0 0.0
    %1798 = vmatmul.mubr.f32.gmra.mxu0 %v1728
    %v1799 = vpop.f32.mrf.mxu0
    %v1800 = vadd.f32 0.0, %v1799
    %v1801 = vpop.f32.mrf.mxu0
    %1802 = vmatprep.mubr.f32.mxu0 0.0
    %1803 = vmatmul.mubr.f32.gmra.mxu0 %v1731
    %v1804 = vpop.f32.mrf.mxu0
    %v1805 = vadd.f32 0.0, %v1804
    %v1806 = vpop.f32.mrf.mxu0
    %1807 = vdwg.mxu0
    %v1808 = vadd.f32 %v1393, %v1800
    %v1809 = vadd.f32 %v1394, %v1805
    %v1810 = vlaneseq
    %v1811 = vshrl.u32 %v1810, 7
    %v1812 = vsub.s32 2, %v1811
    %v1813 = vrot.slane %v26, %v1812
    %v1814 = vadd.f32 %v1808, %v1813
    %v1815 = vadd.f32 %v1809, %v1813
    %v1816 = vadd.f32 %v24, %v1814
    %v1817 = vadd.f32 %v25, %v1815
    %v1818 = vsel %vm27, %v1816, 0.0
    %1819 = vadd.xlane.f32.xlu0 %v1818
    %v1820 = vpop.xlane.xlu0 %1819
    %v1821 = vsel %vm27, %v1817, 0.0
    %1822 = vadd.xlane.f32.xlu0 %v1821
    %v1823 = vpop.xlane.xlu0 %1822
    %v1824 = vmul.f32 %v1820, %v34
    %v1825 = vmul.f32 %v1823, %v34
    %v1826 = vsub.f32 %v1816, %v1824
    %v1827 = vsub.f32 %v1817, %v1825
    %v1828 = vmul.f32 %v1826, %v1826
    %v1829 = vmul.f32 %v1827, %v1827
    %v1830 = vsel %vm27, %v1828, 0.0
    %1831 = vadd.xlane.f32.xlu0 %v1830
    %v1832 = vpop.xlane.xlu0 %1831
    %v1833 = vsel %vm27, %v1829, 0.0
    %1834 = vadd.xlane.f32.xlu0 %v1833
    %v1835 = vpop.xlane.xlu0 %1834
    %v1836 = vmul.f32 %v1832, %v34
    %v1837 = vmul.f32 %v1835, %v34
    %v1838 = vadd.f32 %v1836, 1e-05
    %v1839 = vadd.f32 %v1837, 1e-05
    %v1840 = vrsqrt.pop %v1838
    %v1841 = vrsqrt.pop %v1839
    %v1842 = vmul.f32 %v1826, %v1840
    %v1843 = vmul.f32 %v1827, %v1841
    %v1844 = vlaneseq
    %v1845 = vshrl.u32 %v1844, 7
    %v1846 = vsub.s32 3, %v1845
    %v1847 = vrot.slane %v26, %v1846
    %v1848 = vmul.f32 %v1842, %v1847
    %v1849 = vmul.f32 %v1843, %v1847
    %v1850 = vlaneseq
    %v1851 = vshrl.u32 %v1850, 7
    %v1852 = vsub.s32 4, %v1851
    %v1853 = vrot.slane %v26, %v1852
    %v1854 = vadd.f32 %v1848, %v1853
    %v1855 = vadd.f32 %v1849, %v1853
    %v1856 = vld [vmem:[%s4] sm:$0xff]
    %v1857 = vld [vmem:[%s4 + $0x8] sm:$0xff]
    %v1858 = vld [vmem:[%s4 + $0x10] sm:$0xff]
    %v1859 = vld [vmem:[%s4 + $0x18] sm:$0xff]
    %v1860 = vlaneseq
    %v1861 = vshrl.u32 %v1860, 7
    %v1862 = vsub.s32 7, %v1861
    %v1863 = vrot.slane %v26, %v1862
    %v1865 = vsel %vm27, %v1854, 0
    %v1868 = vsel %vm27, %v1855, 0
    %1870 = vmatprep.subr.mxu0 0.0
    %1871 = vmatpush1.msra.mxu0 0.0
    %1872 = vmatprep.subr.mxu0 0.0
    %1873 = vmatpush1.msra.mxu0 0.0
    %1874 = vmatprep.subr.mxu0 0.0
    %1875 = vmatpush1.msra.mxu0 0.0
    %1876 = vmatprep.subr.mxu0 0.0
    %1877 = vmatpush1.msra.mxu0 0.0
    %1878 = vmatprep.subr.mxu0 0.0
    %1879 = vmatpush1.msra.mxu0 0.0
    %1880 = vmatprep.subr.mxu0 0.0
    %1881 = vmatpush1.msra.mxu0 0.0
    %1882 = vmatprep.subr.mxu0 0.0
    %1883 = vmatpush1.msra.mxu0 0.0
    %1884 = vmatprep.subr.mxu0 0.0
    %1885 = vmatpush1.msra.mxu0 0.0
    %1886 = vmatprep.subr.mxu0 0.0
    %1887 = vmatpush1.msra.mxu0 0.0
    %1888 = vmatprep.subr.mxu0 0.0
    %1889 = vmatpush1.msra.mxu0 0.0
    %1890 = vmatprep.subr.mxu0 0.0
    %1891 = vmatpush1.msra.mxu0 0.0
    %1892 = vmatprep.subr.mxu0 0.0
    %1893 = vmatpush1.msra.mxu0 0.0
    %1894 = vmatprep.subr.mxu0 0.0
    %1895 = vmatpush1.msra.mxu0 %v1859
    %1896 = vmatprep.subr.mxu0 0.0
    %1897 = vmatpush1.msra.mxu0 %v1858
    %1898 = vmatprep.subr.mxu0 0.0
    %1899 = vmatpush1.msra.mxu0 %v1857
    %1900 = vmatprep.subr.mxu0 0.0
    %1901 = vmatpush1.msra.mxu0 %v1856
    %1902 = vmatprep.subr.mxu0 0.0
    %1903 = vmatpush2.msra.mxu0 0.0
    %1904 = vmatprep.subr.mxu0 0.0
    %1905 = vmatpush2.msra.mxu0 0.0
    %1906 = vmatprep.subr.mxu0 0.0
    %1907 = vmatpush2.msra.mxu0 0.0
    %1908 = vmatprep.subr.mxu0 0.0
    %1909 = vmatpush2.msra.mxu0 0.0
    %1910 = vmatprep.subr.mxu0 0.0
    %1911 = vmatpush2.msra.mxu0 0.0
    %1912 = vmatprep.subr.mxu0 0.0
    %1913 = vmatpush2.msra.mxu0 0.0
    %1914 = vmatprep.subr.mxu0 0.0
    %1915 = vmatpush2.msra.mxu0 0.0
    %1916 = vmatprep.subr.mxu0 0.0
    %1917 = vmatpush2.msra.mxu0 0.0
    %1918 = vmatprep.subr.mxu0 0.0
    %1919 = vmatpush2.msra.mxu0 0.0
    %1920 = vmatprep.subr.mxu0 0.0
    %1921 = vmatpush2.msra.mxu0 0.0
    %1922 = vmatprep.subr.mxu0 0.0
    %1923 = vmatpush2.msra.mxu0 0.0
    %1924 = vmatprep.subr.mxu0 0.0
    %1925 = vmatpush2.msra.mxu0 0.0
    %1926 = vmatprep.subr.mxu0 0.0
    %1927 = vmatpush2.msra.mxu0 0.0
    %1928 = vmatprep.subr.mxu0 0.0
    %1929 = vmatpush2.msra.mxu0 0.0
    %1930 = vmatprep.subr.mxu0 0.0
    %1931 = vmatpush2.msra.mxu0 0.0
    %1932 = vmatprep.subr.mxu0 0.0
    %1933 = vmatpush2.msra.mxu0 0.0
    %1934 = vmatprep.mubr.f32.mxu0 0.0
    %1935 = vmatmul.mubr.f32.gmra.mxu0 %v1865
    %v1936 = vpop.f32.mrf.mxu0
    %v1937 = vadd.f32 %v1863, %v1936
    %v1938 = vpop.f32.mrf.mxu0
    %1939 = vmatprep.mubr.f32.mxu0 0.0
    %1940 = vmatmul.mubr.f32.gmra.mxu0 %v1868
    %v1941 = vpop.f32.mrf.mxu0
    %v1942 = vadd.f32 %v1863, %v1941
    %v1943 = vpop.f32.mrf.mxu0
    %1944 = vdwg.mxu0
    %v1945 = vmul.f32 %v1937, 0.5
    %v1946 = vmul.f32 %v1942, 0.5
    %v1947 = vmul.f32 %v1937, 0.70710677
    %v1948 = vmul.f32 %v1942, 0.70710677
    %v1949 = vand.u32 2147483647, %v1947
    %v1950 = vand.u32 2147483647, %v1948
    %v1951 = vmul.f32 %v1949, 0.3275911
    %v1952 = vmul.f32 %v1950, 0.3275911
    %v1953 = vadd.f32 %v1951, 1.0
    %v1954 = vadd.f32 %v1952, 1.0
    %v1955 = vrcp.pop %v1953
    %v1956 = vmul.f32 1.0, %v1955
    %v1957 = vrcp.pop %v1954
    %v1958 = vmul.f32 1.0, %v1957
    %v1959 = vmul.f32 %v1956, 1.0614054
    %v1960 = vmul.f32 %v1958, 1.0614054
    %v1961 = vadd.f32 %v1959, -1.4531521
    %v1962 = vadd.f32 %v1960, -1.4531521
    %v1963 = vmul.f32 %v1956, %v1961
    %v1964 = vmul.f32 %v1958, %v1962
    %v1965 = vadd.f32 %v1963, 1.4214138
    %v1966 = vadd.f32 %v1964, 1.4214138
    %v1967 = vmul.f32 %v1956, %v1965
    %v1968 = vmul.f32 %v1958, %v1966
    %v1969 = vadd.f32 %v1967, -0.28449672
    %v1970 = vadd.f32 %v1968, -0.28449672
    %v1971 = vmul.f32 %v1956, %v1969
    %v1972 = vmul.f32 %v1958, %v1970
    %v1973 = vadd.f32 %v1971, 0.2548296
    %v1974 = vadd.f32 %v1972, 0.2548296
    %v1975 = vmul.f32 %v1956, %v1973
    %v1976 = vmul.f32 %v1958, %v1974
    %v1977 = vmul.f32 %v1949, %v1949
    %v1978 = vmul.f32 %v1950, %v1950
    %v1979 = vsub.f32 0.0, %v1977
    %v1980 = vsub.f32 0.0, %v1978
    %v1981 = vmul.f32 %v1979, 1.442695
    %v1982 = vpow.pop %v1981
    %v1983 = vmul.f32 %v1980, 1.442695
    %v1984 = vpow.pop %v1983
    %v1985 = vmul.f32 %v1975, %v1982
    %v1986 = vmul.f32 %v1976, %v1984
    %v1987 = vsub.f32 1.0, %v1985
    %v1988 = vsub.f32 1.0, %v1986
    %vm1989 = vcmp.ge.f32.partialorder %v1947, 0.0
    %vm1990 = vcmp.ge.f32.partialorder %v1948, 0.0
    %v1991 = vsub.f32 0.0, %v1987
    %v1992 = vsub.f32 0.0, %v1988
    %v1993 = vsel %vm1989, %v1987, %v1991
    %v1994 = vsel %vm1990, %v1988, %v1992
    %v1995 = vadd.f32 %v1993, 1.0
    %v1996 = vadd.f32 %v1994, 1.0
    %v1997 = vmul.f32 %v1945, %v1995
    %v1998 = vmul.f32 %v1946, %v1996
    %v1999 = vld [vmem:[%s5] sm:$0xff]
    %v2000 = vld [vmem:[%s5 + $0x8] sm:$0xff]
    %v2001 = vld [vmem:[%s5 + $0x10] sm:$0xff]
    %v2002 = vld [vmem:[%s5 + $0x18] sm:$0xff]
    %v2003 = vld [vmem:[%s5 + $0x20] sm:$0xff]
    %v2004 = vld [vmem:[%s5 + $0x28] sm:$0xff]
    %v2005 = vld [vmem:[%s5 + $0x30] sm:$0xff]
    %v2006 = vld [vmem:[%s5 + $0x38] sm:$0xff]
    %v2007 = vld [vmem:[%s5 + $0x40] sm:$0xff]
    %v2008 = vld [vmem:[%s5 + $0x48] sm:$0xff]
    %v2009 = vld [vmem:[%s5 + $0x50] sm:$0xff]
    %v2010 = vld [vmem:[%s5 + $0x58] sm:$0xff]
    %v2011 = vld [vmem:[%s5 + $0x60] sm:$0xff]
    %v2012 = vld [vmem:[%s5 + $0x68] sm:$0xff]
    %v2013 = vld [vmem:[%s5 + $0x70] sm:$0xff]
    %v2014 = vld [vmem:[%s5 + $0x78] sm:$0xff]
    %v2015 = vlaneseq
    %v2016 = vshrl.u32 %v2015, 7
    %v2017 = vsub.s32 5, %v2016
    %v2018 = vrot.slane %v26, %v2017
    %2019 = vmatprep.subr.mxu0 0.0
    %2020 = vmatpush1.msra.mxu0 %v2014
    %2021 = vmatprep.subr.mxu0 0.0
    %2022 = vmatpush1.msra.mxu0 %v2013
    %2023 = vmatprep.subr.mxu0 0.0
    %2024 = vmatpush1.msra.mxu0 %v2012
    %2025 = vmatprep.subr.mxu0 0.0
    %2026 = vmatpush1.msra.mxu0 %v2011
    %2027 = vmatprep.subr.mxu0 0.0
    %2028 = vmatpush1.msra.mxu0 %v2010
    %2029 = vmatprep.subr.mxu0 0.0
    %2030 = vmatpush1.msra.mxu0 %v2009
    %2031 = vmatprep.subr.mxu0 0.0
    %2032 = vmatpush1.msra.mxu0 %v2008
    %2033 = vmatprep.subr.mxu0 0.0
    %2034 = vmatpush1.msra.mxu0 %v2007
    %2035 = vmatprep.subr.mxu0 0.0
    %2036 = vmatpush1.msra.mxu0 %v2006
    %2037 = vmatprep.subr.mxu0 0.0
    %2038 = vmatpush1.msra.mxu0 %v2005
    %2039 = vmatprep.subr.mxu0 0.0
    %2040 = vmatpush1.msra.mxu0 %v2004
    %2041 = vmatprep.subr.mxu0 0.0
    %2042 = vmatpush1.msra.mxu0 %v2003
    %2043 = vmatprep.subr.mxu0 0.0
    %2044 = vmatpush1.msra.mxu0 %v2002
    %2045 = vmatprep.subr.mxu0 0.0
    %2046 = vmatpush1.msra.mxu0 %v2001
    %2047 = vmatprep.subr.mxu0 0.0
    %2048 = vmatpush1.msra.mxu0 %v2000
    %2049 = vmatprep.subr.mxu0 0.0
    %2050 = vmatpush1.msra.mxu0 %v1999
    %2051 = vmatprep.subr.mxu0 0.0
    %2052 = vmatpush2.msra.mxu0 0.0
    %2053 = vmatprep.subr.mxu0 0.0
    %2054 = vmatpush2.msra.mxu0 0.0
    %2055 = vmatprep.subr.mxu0 0.0
    %2056 = vmatpush2.msra.mxu0 0.0
    %2057 = vmatprep.subr.mxu0 0.0
    %2058 = vmatpush2.msra.mxu0 0.0
    %2059 = vmatprep.subr.mxu0 0.0
    %2060 = vmatpush2.msra.mxu0 0.0
    %2061 = vmatprep.subr.mxu0 0.0
    %2062 = vmatpush2.msra.mxu0 0.0
    %2063 = vmatprep.subr.mxu0 0.0
    %2064 = vmatpush2.msra.mxu0 0.0
    %2065 = vmatprep.subr.mxu0 0.0
    %2066 = vmatpush2.msra.mxu0 0.0
    %2067 = vmatprep.subr.mxu0 0.0
    %2068 = vmatpush2.msra.mxu0 0.0
    %2069 = vmatprep.subr.mxu0 0.0
    %2070 = vmatpush2.msra.mxu0 0.0
    %2071 = vmatprep.subr.mxu0 0.0
    %2072 = vmatpush2.msra.mxu0 0.0
    %2073 = vmatprep.subr.mxu0 0.0
    %2074 = vmatpush2.msra.mxu0 0.0
    %2075 = vmatprep.subr.mxu0 0.0
    %2076 = vmatpush2.msra.mxu0 0.0
    %2077 = vmatprep.subr.mxu0 0.0
    %2078 = vmatpush2.msra.mxu0 0.0
    %2079 = vmatprep.subr.mxu0 0.0
    %2080 = vmatpush2.msra.mxu0 0.0
    %2081 = vmatprep.subr.mxu0 0.0
    %2082 = vmatpush2.msra.mxu0 0.0
    %2083 = vmatprep.mubr.f32.mxu0 0.0
    %2084 = vmatmul.mubr.f32.gmra.mxu0 %v1997
    %v2085 = vpop.f32.mrf.mxu0
    %v2086 = vadd.f32 %v2018, %v2085
    %v2087 = vpop.f32.mrf.mxu0
    %2088 = vmatprep.mubr.f32.mxu0 0.0
    %2089 = vmatmul.mubr.f32.gmra.mxu0 %v1998
    %v2090 = vpop.f32.mrf.mxu0
    %v2091 = vadd.f32 %v2018, %v2090
    %v2092 = vpop.f32.mrf.mxu0
    %2093 = vdwg.mxu0
    %v2094 = vadd.f32 %v1816, %v2086
    %v2095 = vadd.f32 %v1817, %v2091
    %2096 = vst.msk [vmem:[#allocation2] sm:$0xff] %vm27, %v2094
    %2097 = vst.msk [vmem:[#allocation2 + $0x8] sm:$0xff] %vm27, %v2095
    // Predicated region
    $region26: #{transformer_block.1} parent=1 // pred_check
      _
    $region27: #{transformer_block.1} parent=1 // pred_check_branch
      %2099 = sbr.rel (0) target = $region29
    $region28: #{transformer_block.1} parent=1 // pred_region
      %s2101 = ssub.s32 256, 256
      %2102 = vsyncadd [#allocation3], %s2101
      %s2103 = sshll.u32 [#allocation2], 4
      %s2104 = int_to_ptr.vmem [resolvable:$true] %s2103
      %2109 = dma.vmem_to_hbm [thread:$0]  %s2104, 256, %s6, [#allocation3], 128, 128, 8
    $region29: #{transformer_block.1} parent=1 // pred_fallthru
      _
    // Predicated region
    $region30: #{transformer_block.1} parent=1 // pred_check
      _
    $region31: #{transformer_block.1} parent=1 // pred_check_branch
      %2111 = sbr.rel (0) target = $region33
    $region32: #{transformer_block.1} parent=1 // pred_region
      %2112 = dma.done [#allocation3], 256
    $region33: #{transformer_block.1} parent=1 // pred_fallthru
      _
    %2113 = vsyncpa [#allocation3], 1

</llo_original>
